<compile_context>
chip_gen: v7x
topology: tpu7x:2x2x1
jax: 0.10.0
libtpu: 0.0.40
codegen_flags: <defaults>
</compile_context>

<pallas_src>
import jax
import jax.numpy as jnp
from jax import lax
from jax.experimental import pallas as pl
from jax.experimental.pallas import tpu as pltpu

LN_EPS = 1e-5
RATIO = 0.2


def _round_up(n, m):
    return ((n + m - 1) // m) * m


def _make_kernel(c_hid_real, c_hid_pad, c_in_real, ratio, eps):
    """Kernel with the real (unpadded) channel counts baked in."""
    inv_hid = 1.0 / float(c_hid_real)
    inv_in = 1.0 / float(c_in_real)
    need_mask = c_hid_pad != c_hid_real

    def kernel(x_ref, w1t_ref, g1_ref, b1_ref, w2t_ref, g2_ref, b2_ref, o_ref):
        x = x_ref[...]  # (bn, c_in) native dtype -> straight to the MXU

        # fc[0]: Linear(c_in -> c_hid, bias=False): x @ W1^T, f32 accumulate.
        h = jnp.dot(x, w1t_ref[...], preferred_element_type=jnp.float32)

        # fc[1]: LayerNorm(c_hid), two-pass statistics over the real channels.
        # Padded lanes of h are exactly 0 (zero-padded W1^T columns), so the
        # raw sum is exact; mask the centered value so var stays exact too.
        mu = jnp.sum(h, axis=-1, keepdims=True) * inv_hid
        centered = h - mu
        if need_mask:
            col = lax.broadcasted_iota(jnp.int32, (1, c_hid_pad), 1)
            centered = jnp.where(col < c_hid_real, centered, 0.0)
        var = jnp.sum(centered * centered, axis=-1, keepdims=True) * inv_hid
        h = centered * lax.rsqrt(var + eps)
        h = h * g1_ref[...] + b1_ref[...]  # padded gamma/beta are 0 -> lanes stay 0

        # fc[2]: Linear(c_hid -> c_in, bias=False).  Cast the small activation
        # tile back to the weight dtype so bf16 inputs keep the fast MXU path.
        z = jnp.dot(h.astype(w2t_ref.dtype), w2t_ref[...],
                    preferred_element_type=jnp.float32)

        # fc[3]: LayerNorm(c_in), two-pass (this axis is unpadded).
        mu = jnp.sum(z, axis=-1, keepdims=True) * inv_in
        centered = z - mu
        var = jnp.sum(centered * centered, axis=-1, keepdims=True) * inv_in
        z = centered * lax.rsqrt(var + eps)
        z = z * g2_ref[...] + b2_ref[...]

        # Residual mix: ratio * fc(x) + (1 - ratio) * x
        o_ref[...] = (ratio * z
                      + (1.0 - ratio) * x.astype(jnp.float32)).astype(o_ref.dtype)

    return kernel


def adapter_fc(image_features, w1, g1, b1, w2, g2, b2, *,
               block_n=None, vmem_budget_bytes=40 << 20):
    """image_features: (N, c_in).  w1: (c_hid, c_in), w2: (c_in, c_hid)
    (PyTorch Linear weight layout).  g/b: LayerNorm affine params."""
    N, c_in = image_features.shape
    c_hid = w1.shape[0]
    dt = image_features.dtype
    itemsize = jnp.dtype(dt).itemsize

    # Only the hidden (intermediate) axis gets lane padding; it never touches HBM.
    c_hid_p = max(_round_up(c_hid, 128), 128)

    # --- row-tile selection ---------------------------------------------------
    # Double-buffered streamed bytes/row (x in + out) + f32 intermediates/row.
    per_row = 4 * c_in * itemsize + 4 * (c_hid_p + 2 * c_in)
    weight_bytes = 2 * (2 * c_in * c_hid_p * itemsize) + 2 * 4 * 2 * (c_hid_p + c_in)
    if N < 8:
        bn = N                                   # full-extent rows (always legal)
    else:
        bn = 1024 if block_n is None else block_n
        vmem_cap = max((vmem_budget_bytes - weight_bytes) // max(per_row, 1), 8)
        bn = min(bn, vmem_cap)
        bn = min(bn, _round_up(pl.cdiv(N, 2), 8))  # >= 2 grid blocks for v7x megacore
        bn = max(8, (bn // 8) * 8)
    n_blocks = pl.cdiv(N, bn)

    # VMEM limit from the actual footprint (+ headroom), not a blanket 64 MiB.
    stream_bytes = 2 * 2 * bn * c_in * itemsize
    interm_bytes = bn * (c_hid_p + 2 * c_in) * 4
    vmem_limit = int(min(max(stream_bytes + weight_bytes + interm_bytes + (2 << 20),
                             8 << 20), 48 << 20))

    # Pre-transpose + zero-pad the tiny weights once (hidden axis only); keep
    # them in the input dtype so the MXU sees native operands.
    # TODO(synk): for v5e with f32 inputs, casting x/weights to bf16 here halves
    # the streamed bytes if the caller's accuracy budget allows it.
    w1t = jnp.pad(jnp.transpose(w1), ((0, 0), (0, c_hid_p - c_hid))).astype(dt)
    w2t = jnp.pad(jnp.transpose(w2), ((0, c_hid_p - c_hid), (0, 0))).astype(dt)
    g1_ = jnp.pad(g1, (0, c_hid_p - c_hid)).astype(jnp.float32).reshape(1, c_hid_p)
    b1_ = jnp.pad(b1, (0, c_hid_p - c_hid)).astype(jnp.float32).reshape(1, c_hid_p)
    g2_ = g2.astype(jnp.float32).reshape(1, c_in)
    b2_ = b2.astype(jnp.float32).reshape(1, c_in)

    kernel = _make_kernel(c_hid, c_hid_p, c_in, RATIO, LN_EPS)

    def build(single_buffer_weights):
        if single_buffer_weights:
            def const(shape):  # grid-invariant operand, single VMEM copy
                return pl.BlockSpec(shape, lambda i: (0, 0),
                                    pipeline_mode=pl.Buffered(1))
        else:
            def const(shape):
                return pl.BlockSpec(shape, lambda i: (0, 0))
        return pl.pallas_call(
            kernel,
            out_shape=jax.ShapeDtypeStruct((N, c_in), dt),
            grid_spec=pltpu.PrefetchScalarGridSpec(
                num_scalar_prefetch=0,
                grid=(n_blocks,),
                in_specs=[
                    pl.BlockSpec((bn, c_in), lambda i: (i, 0)),  # x row tile
                    const((c_in, c_hid_p)),                      # W1^T
                    const((1, c_hid_p)),                         # gamma1
                    const((1, c_hid_p)),                         # beta1
                    const((c_hid_p, c_in)),                      # W2^T
                    const((1, c_in)),                            # gamma2
                    const((1, c_in)),                            # beta2
                ],
                out_specs=pl.BlockSpec((bn, c_in), lambda i: (i, 0)),
            ),
            compiler_params=pltpu.CompilerParams(
                dimension_semantics=("parallel",),
                vmem_limit_bytes=vmem_limit),
        )

    args = (image_features, w1t, g1_, b1_, w2t, g2_, b2_)
    try:
        # Preferred: single-buffered grid-invariant weights (halves their VMEM).
        out = build(True)(*args)
    except Exception:
        # Fallback if this jax/Mosaic version rejects pl.Buffered(1).
        out = build(False)(*args)
    return out


def reference_adapter_fc(x, w1, g1, b1, w2, g2, b2):
    """Pure-JAX reference matching the PyTorch forward."""
    x = x.astype(jnp.float32)
    h = x @ w1.T.astype(jnp.float32)
    mu = h.mean(-1, keepdims=True)
    var = ((h - mu) ** 2).mean(-1, keepdims=True)
    h = (h - mu) / jnp.sqrt(var + LN_EPS) * g1 + b1
    z = h @ w2.T.astype(jnp.float32)
    mu = z.mean(-1, keepdims=True)
    var = ((z - mu) ** 2).mean(-1, keepdims=True)
    z = (z - mu) / jnp.sqrt(var + LN_EPS) * g2 + b2
    return RATIO * z + (1.0 - RATIO) * x


if __name__ == "__main__":
    # Deterministic small setup: c_in=32, reduction=4 -> hidden=8.  N=300 is
    # deliberately not a multiple of the row tile so the ragged last block
    # (handled by Pallas block clipping, no wrapper padding) is exercised, and
    # the auto-selected block_n gives 2 grid steps (megacore path).
    key = jax.random.PRNGKey(0)
    N, c_in, reduction = 300, 32, 4
    c_hid = c_in // reduction

    k_x, k_w1, k_w2 = jax.random.split(key, 3)
    x = jax.random.normal(k_x, (N, c_in), dtype=jnp.float32)

    # Linear weights in PyTorch layout (out, in), kaiming-uniform-ish init.
    lim1 = 1.0 / jnp.sqrt(c_in)
    lim2 = 1.0 / jnp.sqrt(c_hid)
    w1 = jax.random.uniform(k_w1, (c_hid, c_in), jnp.float32, -lim1, lim1)
    w2 = jax.random.uniform(k_w2, (c_in, c_hid), jnp.float32, -lim2, lim2)
    # LayerNorm affine params (PyTorch default init: weight=1, bias=0).
    g1 = jnp.ones((c_hid,), jnp.float32)
    b1 = jnp.zeros((c_hid,), jnp.float32)
    g2 = jnp.ones((c_in,), jnp.float32)
    b2 = jnp.zeros((c_in,), jnp.float32)

    out = adapter_fc(x, w1, g1, b1, w2, g2, b2)
    out = jax.block_until_ready(out)

    ref = reference_adapter_fc(x, w1, g1, b1, w2, g2, b2)
    assert out.shape == (N, c_in)
    err = float(jnp.max(jnp.abs(out.astype(jnp.float32) - ref)))
    assert err < 5e-4, err
    print("KERNEL_OK")
</pallas_src>

<mosaic_0001>
module attributes {stable_mosaic.version = 11 : i64} {
  func.func @kernel(%arg0: i32, %arg1: memref<152x32xf32, #tpu.memory_space<vmem>>, %arg2: memref<32x128xf32, #tpu.memory_space<vmem>>, %arg3: memref<1x128xf32, #tpu.memory_space<vmem>>, %arg4: memref<1x128xf32, #tpu.memory_space<vmem>>, %arg5: memref<128x32xf32, #tpu.memory_space<vmem>>, %arg6: memref<1x32xf32, #tpu.memory_space<vmem>>, %arg7: memref<1x32xf32, #tpu.memory_space<vmem>>, %arg8: memref<152x32xf32, #tpu.memory_space<vmem>>) attributes {dimension_semantics = [#tpu.dimension_semantics<parallel>], iteration_bounds = array<i64: 2>, scalar_prefetch = 0 : i64, scratch_operands = 0 : i64, tpu.core_type = #tpu.core_type<tc>, window_params = [{transform_indices = @transform_0, window_bounds = array<i64: 152, 32>}, {pipeline_mode = #tpu.pipeline_mode<synchronous>, transform_indices = @transform_1, window_bounds = array<i64: 32, 128>}, {pipeline_mode = #tpu.pipeline_mode<synchronous>, transform_indices = @transform_2, window_bounds = array<i64: 1, 128>}, {pipeline_mode = #tpu.pipeline_mode<synchronous>, transform_indices = @transform_3, window_bounds = array<i64: 1, 128>}, {pipeline_mode = #tpu.pipeline_mode<synchronous>, transform_indices = @transform_4, window_bounds = array<i64: 128, 32>}, {pipeline_mode = #tpu.pipeline_mode<synchronous>, transform_indices = @transform_5, window_bounds = array<i64: 1, 32>}, {pipeline_mode = #tpu.pipeline_mode<synchronous>, transform_indices = @transform_6, window_bounds = array<i64: 1, 32>}, {transform_indices = @transform_7, window_bounds = array<i64: 152, 32>}]} {
    %c0 = arith.constant 0 : index
    %c0_0 = arith.constant 0 : index
    %0 = vector.load %arg1[%c0, %c0_0] : memref<152x32xf32, #tpu.memory_space<vmem>>, vector<152x32xf32>
    %c0_1 = arith.constant 0 : index
    %c0_2 = arith.constant 0 : index
    %1 = vector.load %arg2[%c0_1, %c0_2] : memref<32x128xf32, #tpu.memory_space<vmem>>, vector<32x128xf32>
    %cst = arith.constant dense<0.000000e+00> : vector<152x128xf32>
    %2 = tpu.matmul %0, %1, %cst {dimension_numbers = #tpu.dot_dimension_numbers<[1], [0], [0], [1], [0, 0, 1, 1], [], []>} : vector<152x32xf32>, vector<32x128xf32>, vector<152x128xf32> -> vector<152x128xf32>
    %cst_3 = arith.constant dense<0.000000e+00> : vector<152xf32>
    %3 = vector.multi_reduction <add>, %2, %cst_3 [1] : vector<152x128xf32> to vector<152xf32>
    %4 = vector.shape_cast %3 : vector<152xf32> to vector<152x1xf32>
    %cst_4 = arith.constant 1.250000e-01 : f32
    %5 = vector.broadcast %cst_4 : f32 to vector<152x1xf32>
    %6 = arith.mulf %4, %5 : vector<152x1xf32>
    %7 = vector.broadcast %6 : vector<152x1xf32> to vector<152x128xf32>
    %8 = arith.subf %2, %7 : vector<152x128xf32>
    %9 = tpu.iota {dimensions = array<i32: 1>} : vector<1x128xi32>
    %c8_i32 = arith.constant 8 : i32
    %10 = vector.broadcast %c8_i32 : i32 to vector<1x128xi32>
    %11 = arith.cmpi slt, %9, %10 : vector<1x128xi32>
    %cst_5 = arith.constant 0.000000e+00 : f32
    %12 = vector.shape_cast %11 : vector<1x128xi1> to vector<1x128xi1>
    %13 = vector.broadcast %12 : vector<1x128xi1> to vector<152x128xi1>
    %14 = vector.broadcast %cst_5 : f32 to vector<152x128xf32>
    %15 = arith.select %13, %8, %14 : vector<152x128xi1>, vector<152x128xf32>
    %16 = arith.mulf %15, %15 : vector<152x128xf32>
    %cst_6 = arith.constant dense<0.000000e+00> : vector<152xf32>
    %17 = vector.multi_reduction <add>, %16, %cst_6 [1] : vector<152x128xf32> to vector<152xf32>
    %18 = vector.shape_cast %17 : vector<152xf32> to vector<152x1xf32>
    %cst_7 = arith.constant 1.250000e-01 : f32
    %19 = vector.broadcast %cst_7 : f32 to vector<152x1xf32>
    %20 = arith.mulf %18, %19 : vector<152x1xf32>
    %cst_8 = arith.constant 9.99999974E-6 : f32
    %21 = vector.broadcast %cst_8 : f32 to vector<152x1xf32>
    %22 = arith.addf %20, %21 : vector<152x1xf32>
    %23 = math.rsqrt %22 : vector<152x1xf32>
    %24 = vector.broadcast %23 : vector<152x1xf32> to vector<152x128xf32>
    %25 = arith.mulf %15, %24 : vector<152x128xf32>
    %c0_9 = arith.constant 0 : index
    %c0_10 = arith.constant 0 : index
    %26 = vector.load %arg3[%c0_9, %c0_10] : memref<1x128xf32, #tpu.memory_space<vmem>>, vector<1x128xf32>
    %27 = vector.broadcast %26 : vector<1x128xf32> to vector<152x128xf32>
    %28 = arith.mulf %25, %27 : vector<152x128xf32>
    %c0_11 = arith.constant 0 : index
    %c0_12 = arith.constant 0 : index
    %29 = vector.load %arg4[%c0_11, %c0_12] : memref<1x128xf32, #tpu.memory_space<vmem>>, vector<1x128xf32>
    %30 = vector.broadcast %29 : vector<1x128xf32> to vector<152x128xf32>
    %31 = arith.addf %28, %30 : vector<152x128xf32>
    %c0_13 = arith.constant 0 : index
    %c0_14 = arith.constant 0 : index
    %32 = vector.load %arg5[%c0_13, %c0_14] : memref<128x32xf32, #tpu.memory_space<vmem>>, vector<128x32xf32>
    %cst_15 = arith.constant dense<0.000000e+00> : vector<152x32xf32>
    %33 = tpu.matmul %31, %32, %cst_15 {dimension_numbers = #tpu.dot_dimension_numbers<[1], [0], [0], [1], [0, 0, 1, 1], [], []>} : vector<152x128xf32>, vector<128x32xf32>, vector<152x32xf32> -> vector<152x32xf32>
    %cst_16 = arith.constant dense<0.000000e+00> : vector<152xf32>
    %34 = vector.multi_reduction <add>, %33, %cst_16 [1] : vector<152x32xf32> to vector<152xf32>
    %35 = vector.shape_cast %34 : vector<152xf32> to vector<152x1xf32>
    %cst_17 = arith.constant 3.125000e-02 : f32
    %36 = vector.broadcast %cst_17 : f32 to vector<152x1xf32>
    %37 = arith.mulf %35, %36 : vector<152x1xf32>
    %38 = vector.broadcast %37 : vector<152x1xf32> to vector<152x32xf32>
    %39 = arith.subf %33, %38 : vector<152x32xf32>
    %40 = arith.mulf %39, %39 : vector<152x32xf32>
    %cst_18 = arith.constant dense<0.000000e+00> : vector<152xf32>
    %41 = vector.multi_reduction <add>, %40, %cst_18 [1] : vector<152x32xf32> to vector<152xf32>
    %42 = vector.shape_cast %41 : vector<152xf32> to vector<152x1xf32>
    %cst_19 = arith.constant 3.125000e-02 : f32
    %43 = vector.broadcast %cst_19 : f32 to vector<152x1xf32>
    %44 = arith.mulf %42, %43 : vector<152x1xf32>
    %cst_20 = arith.constant 9.99999974E-6 : f32
    %45 = vector.broadcast %cst_20 : f32 to vector<152x1xf32>
    %46 = arith.addf %44, %45 : vector<152x1xf32>
    %47 = math.rsqrt %46 : vector<152x1xf32>
    %48 = vector.broadcast %47 : vector<152x1xf32> to vector<152x32xf32>
    %49 = arith.mulf %39, %48 : vector<152x32xf32>
    %c0_21 = arith.constant 0 : index
    %c0_22 = arith.constant 0 : index
    %50 = vector.load %arg6[%c0_21, %c0_22] : memref<1x32xf32, #tpu.memory_space<vmem>>, vector<1x32xf32>
    %51 = vector.broadcast %50 : vector<1x32xf32> to vector<152x32xf32>
    %52 = arith.mulf %49, %51 : vector<152x32xf32>
    %c0_23 = arith.constant 0 : index
    %c0_24 = arith.constant 0 : index
    %53 = vector.load %arg7[%c0_23, %c0_24] : memref<1x32xf32, #tpu.memory_space<vmem>>, vector<1x32xf32>
    %54 = vector.broadcast %53 : vector<1x32xf32> to vector<152x32xf32>
    %55 = arith.addf %52, %54 : vector<152x32xf32>
    %cst_25 = arith.constant 2.000000e-01 : f32
    %56 = vector.broadcast %cst_25 : f32 to vector<152x32xf32>
    %57 = arith.mulf %56, %55 : vector<152x32xf32>
    %cst_26 = arith.constant 8.000000e-01 : f32
    %58 = vector.broadcast %cst_26 : f32 to vector<152x32xf32>
    %59 = arith.mulf %58, %0 : vector<152x32xf32>
    %60 = arith.addf %57, %59 : vector<152x32xf32>
    %c0_27 = arith.constant 0 : index
    %c0_28 = arith.constant 0 : index
    %61 = vector.load %arg8[%c0_27, %c0_28] : memref<152x32xf32, #tpu.memory_space<vmem>>, vector<152x32xf32>
    tpu.vector_store %arg8[%c0_27, %c0_28], %60 {strides = array<i32>} : memref<152x32xf32, #tpu.memory_space<vmem>>, vector<152x32xf32>,
    return
  }
  func.func @transform_0(%arg0: i32) -> (i32, i32) {
    %c0_i32 = arith.constant 0 : i32
    %c0_i32_0 = arith.constant 0 : i32
    return %arg0, %c0_i32 : i32, i32
  }
  func.func @transform_1(%arg0: i32) -> (i32, i32) {
    %c0_i32 = arith.constant 0 : i32
    %c0_i32_0 = arith.constant 0 : i32
    %c0_i32_1 = arith.constant 0 : i32
    return %c0_i32, %c0_i32_0 : i32, i32
  }
  func.func @transform_2(%arg0: i32) -> (i32, i32) {
    %c0_i32 = arith.constant 0 : i32
    %c0_i32_0 = arith.constant 0 : i32
    %c0_i32_1 = arith.constant 0 : i32
    return %c0_i32, %c0_i32_0 : i32, i32
  }
  func.func @transform_3(%arg0: i32) -> (i32, i32) {
    %c0_i32 = arith.constant 0 : i32
    %c0_i32_0 = arith.constant 0 : i32
    %c0_i32_1 = arith.constant 0 : i32
    return %c0_i32, %c0_i32_0 : i32, i32
  }
  func.func @transform_4(%arg0: i32) -> (i32, i32) {
    %c0_i32 = arith.constant 0 : i32
    %c0_i32_0 = arith.constant 0 : i32
    %c0_i32_1 = arith.constant 0 : i32
    return %c0_i32, %c0_i32_0 : i32, i32
  }
  func.func @transform_5(%arg0: i32) -> (i32, i32) {
    %c0_i32 = arith.constant 0 : i32
    %c0_i32_0 = arith.constant 0 : i32
    %c0_i32_1 = arith.constant 0 : i32
    return %c0_i32, %c0_i32_0 : i32, i32
  }
  func.func @transform_6(%arg0: i32) -> (i32, i32) {
    %c0_i32 = arith.constant 0 : i32
    %c0_i32_0 = arith.constant 0 : i32
    %c0_i32_1 = arith.constant 0 : i32
    return %c0_i32, %c0_i32_0 : i32, i32
  }
  func.func @transform_7(%arg0: i32) -> (i32, i32) {
    %c0_i32 = arith.constant 0 : i32
    %c0_i32_0 = arith.constant 0 : i32
    return %arg0, %c0_i32 : i32, i32
  }
}

module attributes {stable_mosaic.version = 11 : i64} {
  func.func @kernel(%arg0: i32, %arg1: memref<152x32xf32, #tpu.memory_space<vmem>>, %arg2: memref<32x128xf32, #tpu.memory_space<vmem>>, %arg3: memref<1x128xf32, #tpu.memory_space<vmem>>, %arg4: memref<1x128xf32, #tpu.memory_space<vmem>>, %arg5: memref<128x32xf32, #tpu.memory_space<vmem>>, %arg6: memref<1x32xf32, #tpu.memory_space<vmem>>, %arg7: memref<1x32xf32, #tpu.memory_space<vmem>>, %arg8: memref<152x32xf32, #tpu.memory_space<vmem>>) attributes {dimension_semantics = [#tpu.dimension_semantics<parallel>], iteration_bounds = array<i64: 2>, scalar_prefetch = 0 : i64, scratch_operands = 0 : i64, tpu.core_type = #tpu.core_type<tc>, window_params = [{transform_indices = @transform_0, window_bounds = array<i64: 152, 32>}, {pipeline_mode = #tpu.pipeline_mode<synchronous>, transform_indices = @transform_1, window_bounds = array<i64: 32, 128>}, {pipeline_mode = #tpu.pipeline_mode<synchronous>, transform_indices = @transform_2, window_bounds = array<i64: 1, 128>}, {pipeline_mode = #tpu.pipeline_mode<synchronous>, transform_indices = @transform_3, window_bounds = array<i64: 1, 128>}, {pipeline_mode = #tpu.pipeline_mode<synchronous>, transform_indices = @transform_4, window_bounds = array<i64: 128, 32>}, {pipeline_mode = #tpu.pipeline_mode<synchronous>, transform_indices = @transform_5, window_bounds = array<i64: 1, 32>}, {pipeline_mode = #tpu.pipeline_mode<synchronous>, transform_indices = @transform_6, window_bounds = array<i64: 1, 32>}, {transform_indices = @transform_7, window_bounds = array<i64: 152, 32>}]} {
    %c0 = arith.constant 0 : index
    %c0_0 = arith.constant 0 : index
    %0 = vector.load %arg1[%c0, %c0_0] : memref<152x32xf32, #tpu.memory_space<vmem>>, vector<152x32xf32>
    %c0_1 = arith.constant 0 : index
    %c0_2 = arith.constant 0 : index
    %1 = vector.load %arg2[%c0_1, %c0_2] : memref<32x128xf32, #tpu.memory_space<vmem>>, vector<32x128xf32>
    %cst = arith.constant dense<0.000000e+00> : vector<152x128xf32>
    %2 = tpu.matmul %0, %1, %cst {dimension_numbers = #tpu.dot_dimension_numbers<[1], [0], [0], [1], [0, 0, 1, 1], [], []>} : vector<152x32xf32>, vector<32x128xf32>, vector<152x128xf32> -> vector<152x128xf32>
    %cst_3 = arith.constant dense<0.000000e+00> : vector<152xf32>
    %3 = vector.multi_reduction <add>, %2, %cst_3 [1] : vector<152x128xf32> to vector<152xf32>
    %4 = vector.shape_cast %3 : vector<152xf32> to vector<152x1xf32>
    %cst_4 = arith.constant 1.250000e-01 : f32
    %5 = vector.broadcast %cst_4 : f32 to vector<152x1xf32>
    %6 = arith.mulf %4, %5 : vector<152x1xf32>
    %7 = vector.broadcast %6 : vector<152x1xf32> to vector<152x128xf32>
    %8 = arith.subf %2, %7 : vector<152x128xf32>
    %9 = tpu.iota {dimensions = array<i32: 1>} : vector<1x128xi32>
    %c8_i32 = arith.constant 8 : i32
    %10 = vector.broadcast %c8_i32 : i32 to vector<1x128xi32>
    %11 = arith.cmpi slt, %9, %10 : vector<1x128xi32>
    %cst_5 = arith.constant 0.000000e+00 : f32
    %12 = vector.shape_cast %11 : vector<1x128xi1> to vector<1x128xi1>
    %13 = vector.broadcast %12 : vector<1x128xi1> to vector<152x128xi1>
    %14 = vector.broadcast %cst_5 : f32 to vector<152x128xf32>
    %15 = arith.select %13, %8, %14 : vector<152x128xi1>, vector<152x128xf32>
    %16 = arith.mulf %15, %15 : vector<152x128xf32>
    %cst_6 = arith.constant dense<0.000000e+00> : vector<152xf32>
    %17 = vector.multi_reduction <add>, %16, %cst_6 [1] : vector<152x128xf32> to vector<152xf32>
    %18 = vector.shape_cast %17 : vector<152xf32> to vector<152x1xf32>
    %cst_7 = arith.constant 1.250000e-01 : f32
    %19 = vector.broadcast %cst_7 : f32 to vector<152x1xf32>
    %20 = arith.mulf %18, %19 : vector<152x1xf32>
    %cst_8 = arith.constant 9.99999974E-6 : f32
    %21 = vector.broadcast %cst_8 : f32 to vector<152x1xf32>
    %22 = arith.addf %20, %21 : vector<152x1xf32>
    %23 = math.rsqrt %22 : vector<152x1xf32>
    %24 = vector.broadcast %23 : vector<152x1xf32> to vector<152x128xf32>
    %25 = arith.mulf %15, %24 : vector<152x128xf32>
    %c0_9 = arith.constant 0 : index
    %c0_10 = arith.constant 0 : index
    %26 = vector.load %arg3[%c0_9, %c0_10] : memref<1x128xf32, #tpu.memory_space<vmem>>, vector<1x128xf32>
    %27 = vector.broadcast %26 : vector<1x128xf32> to vector<152x128xf32>
    %28 = arith.mulf %25, %27 : vector<152x128xf32>
    %c0_11 = arith.constant 0 : index
    %c0_12 = arith.constant 0 : index
    %29 = vector.load %arg4[%c0_11, %c0_12] : memref<1x128xf32, #tpu.memory_space<vmem>>, vector<1x128xf32>
    %30 = vector.broadcast %29 : vector<1x128xf32> to vector<152x128xf32>
    %31 = arith.addf %28, %30 : vector<152x128xf32>
    %c0_13 = arith.constant 0 : index
    %c0_14 = arith.constant 0 : index
    %32 = vector.load %arg5[%c0_13, %c0_14] : memref<128x32xf32, #tpu.memory_space<vmem>>, vector<128x32xf32>
    %cst_15 = arith.constant dense<0.000000e+00> : vector<152x32xf32>
    %33 = tpu.matmul %31, %32, %cst_15 {dimension_numbers = #tpu.dot_dimension_numbers<[1], [0], [0], [1], [0, 0, 1, 1], [], []>} : vector<152x128xf32>, vector<128x32xf32>, vector<152x32xf32> -> vector<152x32xf32>
    %cst_16 = arith.constant dense<0.000000e+00> : vector<152xf32>
    %34 = vector.multi_reduction <add>, %33, %cst_16 [1] : vector<152x32xf32> to vector<152xf32>
    %35 = vector.shape_cast %34 : vector<152xf32> to vector<152x1xf32>
    %cst_17 = arith.constant 3.125000e-02 : f32
    %36 = vector.broadcast %cst_17 : f32 to vector<152x1xf32>
    %37 = arith.mulf %35, %36 : vector<152x1xf32>
    %38 = vector.broadcast %37 : vector<152x1xf32> to vector<152x32xf32>
    %39 = arith.subf %33, %38 : vector<152x32xf32>
    %40 = arith.mulf %39, %39 : vector<152x32xf32>
    %cst_18 = arith.constant dense<0.000000e+00> : vector<152xf32>
    %41 = vector.multi_reduction <add>, %40, %cst_18 [1] : vector<152x32xf32> to vector<152xf32>
    %42 = vector.shape_cast %41 : vector<152xf32> to vector<152x1xf32>
    %cst_19 = arith.constant 3.125000e-02 : f32
    %43 = vector.broadcast %cst_19 : f32 to vector<152x1xf32>
    %44 = arith.mulf %42, %43 : vector<152x1xf32>
    %cst_20 = arith.constant 9.99999974E-6 : f32
    %45 = vector.broadcast %cst_20 : f32 to vector<152x1xf32>
    %46 = arith.addf %44, %45 : vector<152x1xf32>
    %47 = math.rsqrt %46 : vector<152x1xf32>
    %48 = vector.broadcast %47 : vector<152x1xf32> to vector<152x32xf32>
    %49 = arith.mulf %39, %48 : vector<152x32xf32>
    %c0_21 = arith.constant 0 : index
    %c0_22 = arith.constant 0 : index
    %50 = vector.load %arg6[%c0_21, %c0_22] : memref<1x32xf32, #tpu.memory_space<vmem>>, vector<1x32xf32>
    %51 = vector.broadcast %50 : vector<1x32xf32> to vector<152x32xf32>
    %52 = arith.mulf %49, %51 : vector<152x32xf32>
    %c0_23 = arith.constant 0 : index
    %c0_24 = arith.constant 0 : index
    %53 = vector.load %arg7[%c0_23, %c0_24] : memref<1x32xf32, #tpu.memory_space<vmem>>, vector<1x32xf32>
    %54 = vector.broadcast %53 : vector<1x32xf32> to vector<152x32xf32>
    %55 = arith.addf %52, %54 : vector<152x32xf32>
    %cst_25 = arith.constant 2.000000e-01 : f32
    %56 = vector.broadcast %cst_25 : f32 to vector<152x32xf32>
    %57 = arith.mulf %56, %55 : vector<152x32xf32>
    %cst_26 = arith.constant 8.000000e-01 : f32
    %58 = vector.broadcast %cst_26 : f32 to vector<152x32xf32>
    %59 = arith.mulf %58, %0 : vector<152x32xf32>
    %60 = arith.addf %57, %59 : vector<152x32xf32>
    %c0_27 = arith.constant 0 : index
    %c0_28 = arith.constant 0 : index
    %61 = vector.load %arg8[%c0_27, %c0_28] : memref<152x32xf32, #tpu.memory_space<vmem>>, vector<152x32xf32>
    tpu.vector_store %arg8[%c0_27, %c0_28], %60 {strides = array<i32>} : memref<152x32xf32, #tpu.memory_space<vmem>>, vector<152x32xf32>,
    return
  }
  func.func @transform_0(%arg0: i32) -> (i32, i32) {
    %c0_i32 = arith.constant 0 : i32
    %c0_i32_0 = arith.constant 0 : i32
    return %arg0, %c0_i32 : i32, i32
  }
  func.func @transform_1(%arg0: i32) -> (i32, i32) {
    %c0_i32 = arith.constant 0 : i32
    %c0_i32_0 = arith.constant 0 : i32
    %c0_i32_1 = arith.constant 0 : i32
    return %c0_i32, %c0_i32_0 : i32, i32
  }
  func.func @transform_2(%arg0: i32) -> (i32, i32) {
    %c0_i32 = arith.constant 0 : i32
    %c0_i32_0 = arith.constant 0 : i32
    %c0_i32_1 = arith.constant 0 : i32
    return %c0_i32, %c0_i32_0 : i32, i32
  }
  func.func @transform_3(%arg0: i32) -> (i32, i32) {
    %c0_i32 = arith.constant 0 : i32
    %c0_i32_0 = arith.constant 0 : i32
    %c0_i32_1 = arith.constant 0 : i32
    return %c0_i32, %c0_i32_0 : i32, i32
  }
  func.func @transform_4(%arg0: i32) -> (i32, i32) {
    %c0_i32 = arith.constant 0 : i32
    %c0_i32_0 = arith.constant 0 : i32
    %c0_i32_1 = arith.constant 0 : i32
    return %c0_i32, %c0_i32_0 : i32, i32
  }
  func.func @transform_5(%arg0: i32) -> (i32, i32) {
    %c0_i32 = arith.constant 0 : i32
    %c0_i32_0 = arith.constant 0 : i32
    %c0_i32_1 = arith.constant 0 : i32
    return %c0_i32, %c0_i32_0 : i32, i32
  }
  func.func @transform_6(%arg0: i32) -> (i32, i32) {
    %c0_i32 = arith.constant 0 : i32
    %c0_i32_0 = arith.constant 0 : i32
    %c0_i32_1 = arith.constant 0 : i32
    return %c0_i32, %c0_i32_0 : i32, i32
  }
  func.func @transform_7(%arg0: i32) -> (i32, i32) {
    %c0_i32 = arith.constant 0 : i32
    %c0_i32_0 = arith.constant 0 : i32
    return %arg0, %c0_i32 : i32, i32
  }
}

</mosaic_0001>

<llo_original>
// kernel: tpu_custom_call.1
$region0: #{tpu_custom_call.1}
  #allocation0 [shape = 'u32[]', space=smem, size = 0x4, offset = 0x4, fixed_abs, tag = 'smem constant byte address 0x4 - core index']
  #allocation1 [shape = 'u32[144,128]{1,0:T(1,128)}', space=vmem, size = 0x12000, scoped, tag = 'internal scratch']
  %s0 = inlined_call_operand.vmem [shape: f32[300,32], index: 0, kind: input, shape index: {}]
  %s1 = inlined_call_operand.vmem [shape: f32[32,128], index: 1, kind: input, shape index: {}]
  %s2 = inlined_call_operand.vmem [shape: f32[1,128], index: 2, kind: input, shape index: {}]
  %s3 = inlined_call_operand.vmem [shape: f32[1,128], index: 3, kind: input, shape index: {}]
  %s4 = inlined_call_operand.vmem [shape: f32[128,32], index: 4, kind: input, shape index: {}]
  %s5 = inlined_call_operand.vmem [shape: f32[1,32], index: 5, kind: input, shape index: {}]
  %s6 = inlined_call_operand.vmem [shape: f32[1,32], index: 6, kind: input, shape index: {}]
  %s7 = inlined_call_operand.vmem [shape: f32[300,32], index: 7, kind: output, shape index: {}]
  %s8 = sld [smem:[#allocation0]]
  $region61: #{tpu_custom_call.1} parent=0
    _
  %s10 = ssub.s32 1, %s8
  %s11 = scalar_select 0, %s10, %s8
  loop: start=0, step=1, limit=4
  $region2: #{tpu_custom_call.1} parent=0 // loop_pre_header
    _
  $region3: #{tpu_custom_call.1} parent=0 // loop_header
    %s13 = sphi 0, %s17
    %p14 = scmp.ge.s32.totalorder %s13, 4
    %s23 = sphi 0, %s25
    %s26 = sphi 0, %s23
    %s27 = sphi 0, %s26
    %s43 = sphi 0, %s27
    %s47 = sphi 0, %s47
    %s49 = sphi 0, %s47
    %s50 = sphi 0, %s49
    %s64 = sphi 0, %s50
    %s68 = sphi 0, %s68
    %s70 = sphi 0, %s68
    %s71 = sphi 0, %s70
    %s85 = sphi 0, %s71
    %s89 = sphi 0, %s89
    %s91 = sphi 0, %s89
    %s92 = sphi 0, %s91
    %s106 = sphi 0, %s92
    %s110 = sphi 0, %s110
    %s112 = sphi 0, %s110
    %s113 = sphi 0, %s112
    %s127 = sphi 0, %s113
    %s131 = sphi 0, %s131
    %s133 = sphi 0, %s131
    %s134 = sphi 0, %s133
    %s148 = sphi 0, %s134
    %s152 = sphi 0, %s152
    %s154 = sphi 0, %s152
    %s155 = sphi 0, %s154
    %s169 = sphi 0, %s155
    %s175 = sphi 0, %s177
    %s178 = sphi 0, %s175
    %s179 = sphi 0, %s178
    %s195 = sphi 0, %s179
  $region4: #{tpu_custom_call.1} parent=0 // loop_header_branch
    %16 = sbr.rel (%p14) target = $region8
  $region5: #{tpu_custom_call.1} parent=0 // loop_body
    %s18 = ssub.s32 %s13, 1
    %s19 = ssub.s32 %s13, 2
    %s20 = sadd.s32 %s13, 1
    %s21 = ssub.s32 %s13, %s20
    %p22 = scmp.eq.s32.totalorder %s21, 0
    %s24 = sadd.s32 %s23, 1
    %s25 = scalar_select %p22, %s23, %s24
    %p28 = pneg %p22
    %p29 = scmp.eq.s32.totalorder %s13, 1
    %p30 = por %p28, %p29
    %p31 = scmp.ne.s32.totalorder %s23, %s26
    %p32 = scmp.eq.s32.totalorder %s13, 0
    %p33 = por %p31, %p32
    %p34 = scmp.ne.s32.totalorder %s23, %s26
    %p35 = scmp.eq.s32.totalorder %s18, 1
    %p36 = por %p34, %p35
    %p37 = scmp.ne.s32.totalorder %s26, %s27
    %p38 = scmp.eq.s32.totalorder %s18, 0
    %p39 = por %p37, %p38
    %p40 = scmp.ne.s32.totalorder %s26, %s27
    %p41 = scmp.eq.s32.totalorder %s19, 1
    %p42 = por %p40, %p41
    %p44 = scmp.ne.s32.totalorder %s27, %s43
    %p45 = scmp.eq.s32.totalorder %s19, 0
    %p46 = por %p44, %p45
    %s48 = sadd.s32 %s47, 1
    %p51 = scmp.eq.s32.totalorder %s13, 1
    %p52 = scmp.ne.s32.totalorder %s47, %s49
    %p53 = scmp.eq.s32.totalorder %s13, 0
    %p54 = por %p52, %p53
    %p55 = scmp.ne.s32.totalorder %s47, %s49
    %p56 = scmp.eq.s32.totalorder %s18, 1
    %p57 = por %p55, %p56
    %p58 = scmp.ne.s32.totalorder %s49, %s50
    %p59 = scmp.eq.s32.totalorder %s18, 0
    %p60 = por %p58, %p59
    %p61 = scmp.ne.s32.totalorder %s49, %s50
    %p62 = scmp.eq.s32.totalorder %s19, 1
    %p63 = por %p61, %p62
    %p65 = scmp.ne.s32.totalorder %s50, %s64
    %p66 = scmp.eq.s32.totalorder %s19, 0
    %p67 = por %p65, %p66
    %s69 = sadd.s32 %s68, 1
    %p72 = scmp.eq.s32.totalorder %s13, 1
    %p73 = scmp.ne.s32.totalorder %s68, %s70
    %p74 = scmp.eq.s32.totalorder %s13, 0
    %p75 = por %p73, %p74
    %p76 = scmp.ne.s32.totalorder %s68, %s70
    %p77 = scmp.eq.s32.totalorder %s18, 1
    %p78 = por %p76, %p77
    %p79 = scmp.ne.s32.totalorder %s70, %s71
    %p80 = scmp.eq.s32.totalorder %s18, 0
    %p81 = por %p79, %p80
    %p82 = scmp.ne.s32.totalorder %s70, %s71
    %p83 = scmp.eq.s32.totalorder %s19, 1
    %p84 = por %p82, %p83
    %p86 = scmp.ne.s32.totalorder %s71, %s85
    %p87 = scmp.eq.s32.totalorder %s19, 0
    %p88 = por %p86, %p87
    %s90 = sadd.s32 %s89, 1
    %p93 = scmp.eq.s32.totalorder %s13, 1
    %p94 = scmp.ne.s32.totalorder %s89, %s91
    %p95 = scmp.eq.s32.totalorder %s13, 0
    %p96 = por %p94, %p95
    %p97 = scmp.ne.s32.totalorder %s89, %s91
    %p98 = scmp.eq.s32.totalorder %s18, 1
    %p99 = por %p97, %p98
    %p100 = scmp.ne.s32.totalorder %s91, %s92
    %p101 = scmp.eq.s32.totalorder %s18, 0
    %p102 = por %p100, %p101
    %p103 = scmp.ne.s32.totalorder %s91, %s92
    %p104 = scmp.eq.s32.totalorder %s19, 1
    %p105 = por %p103, %p104
    %p107 = scmp.ne.s32.totalorder %s92, %s106
    %p108 = scmp.eq.s32.totalorder %s19, 0
    %p109 = por %p107, %p108
    %s111 = sadd.s32 %s110, 1
    %p114 = scmp.eq.s32.totalorder %s13, 1
    %p115 = scmp.ne.s32.totalorder %s110, %s112
    %p116 = scmp.eq.s32.totalorder %s13, 0
    %p117 = por %p115, %p116
    %p118 = scmp.ne.s32.totalorder %s110, %s112
    %p119 = scmp.eq.s32.totalorder %s18, 1
    %p120 = por %p118, %p119
    %p121 = scmp.ne.s32.totalorder %s112, %s113
    %p122 = scmp.eq.s32.totalorder %s18, 0
    %p123 = por %p121, %p122
    %p124 = scmp.ne.s32.totalorder %s112, %s113
    %p125 = scmp.eq.s32.totalorder %s19, 1
    %p126 = por %p124, %p125
    %p128 = scmp.ne.s32.totalorder %s113, %s127
    %p129 = scmp.eq.s32.totalorder %s19, 0
    %p130 = por %p128, %p129
    %s132 = sadd.s32 %s131, 1
    %p135 = scmp.eq.s32.totalorder %s13, 1
    %p136 = scmp.ne.s32.totalorder %s131, %s133
    %p137 = scmp.eq.s32.totalorder %s13, 0
    %p138 = por %p136, %p137
    %p139 = scmp.ne.s32.totalorder %s131, %s133
    %p140 = scmp.eq.s32.totalorder %s18, 1
    %p141 = por %p139, %p140
    %p142 = scmp.ne.s32.totalorder %s133, %s134
    %p143 = scmp.eq.s32.totalorder %s18, 0
    %p144 = por %p142, %p143
    %p145 = scmp.ne.s32.totalorder %s133, %s134
    %p146 = scmp.eq.s32.totalorder %s19, 1
    %p147 = por %p145, %p146
    %p149 = scmp.ne.s32.totalorder %s134, %s148
    %p150 = scmp.eq.s32.totalorder %s19, 0
    %p151 = por %p149, %p150
    %s153 = sadd.s32 %s152, 1
    %p156 = scmp.eq.s32.totalorder %s13, 1
    %p157 = scmp.ne.s32.totalorder %s152, %s154
    %p158 = scmp.eq.s32.totalorder %s13, 0
    %p159 = por %p157, %p158
    %p160 = scmp.ne.s32.totalorder %s152, %s154
    %p161 = scmp.eq.s32.totalorder %s18, 1
    %p162 = por %p160, %p161
    %p163 = scmp.ne.s32.totalorder %s154, %s155
    %p164 = scmp.eq.s32.totalorder %s18, 0
    %p165 = por %p163, %p164
    %p166 = scmp.ne.s32.totalorder %s154, %s155
    %p167 = scmp.eq.s32.totalorder %s19, 1
    %p168 = por %p166, %p167
    %p170 = scmp.ne.s32.totalorder %s155, %s169
    %p171 = scmp.eq.s32.totalorder %s19, 0
    %p172 = por %p170, %p171
    %s173 = ssub.s32 %s13, %s20
    %p174 = scmp.eq.s32.totalorder %s173, 0
    %s176 = sadd.s32 %s175, 1
    %s177 = scalar_select %p174, %s175, %s176
    %p180 = pneg %p174
    %p181 = scmp.eq.s32.totalorder %s13, 1
    %p182 = por %p180, %p181
    %p183 = scmp.ne.s32.totalorder %s175, %s178
    %p184 = scmp.eq.s32.totalorder %s13, 0
    %p185 = por %p183, %p184
    %p186 = scmp.ne.s32.totalorder %s175, %s178
    %p187 = scmp.eq.s32.totalorder %s18, 1
    %p188 = por %p186, %p187
    %p189 = scmp.ne.s32.totalorder %s178, %s179
    %p190 = scmp.eq.s32.totalorder %s18, 0
    %p191 = por %p189, %p190
    %p192 = scmp.ne.s32.totalorder %s178, %s179
    %p193 = scmp.eq.s32.totalorder %s19, 1
    %p194 = por %p192, %p193
    %p196 = scmp.ne.s32.totalorder %s179, %s195
    %p197 = scmp.eq.s32.totalorder %s19, 0
    %p198 = por %p196, %p197
    %p199 = scmp.le.s32.totalorder 1, %s13
    %p200 = scmp.lt.s32.totalorder %s13, 3
    %p201 = pnand %p199, %p200
    %p202 = pneg %p201
    // Predicated region
    $region9: #{tpu_custom_call.1} parent=5 // pred_check
      _
    $region10: #{tpu_custom_call.1} parent=5 // pred_check_branch
      %204 = sbr.rel (%p201) target = $region12
    $region11: #{tpu_custom_call.1} parent=5 // pred_region
      %s205 = ssub.s32 %s13, 1
      // Predicated region
      $region13: #{tpu_custom_call.1} parent=11 // pred_check
        %p206 = pneg %p60
      $region14: #{tpu_custom_call.1} parent=11 // pred_check_branch
        %208 = sbr.rel (%p206) target = $region16
      $region15: #{tpu_custom_call.1} parent=11 // pred_region
        _
      $region16: #{tpu_custom_call.1} parent=11 // pred_fallthru
        _
      // Predicated region
      $region17: #{tpu_custom_call.1} parent=11 // pred_check
        %p209 = pneg %p81
      $region18: #{tpu_custom_call.1} parent=11 // pred_check_branch
        %211 = sbr.rel (%p209) target = $region20
      $region19: #{tpu_custom_call.1} parent=11 // pred_region
        _
      $region20: #{tpu_custom_call.1} parent=11 // pred_fallthru
        _
      // Predicated region
      $region21: #{tpu_custom_call.1} parent=11 // pred_check
        %p212 = pneg %p102
      $region22: #{tpu_custom_call.1} parent=11 // pred_check_branch
        %214 = sbr.rel (%p212) target = $region24
      $region23: #{tpu_custom_call.1} parent=11 // pred_region
        _
      $region24: #{tpu_custom_call.1} parent=11 // pred_fallthru
        _
      // Predicated region
      $region25: #{tpu_custom_call.1} parent=11 // pred_check
        %p215 = pneg %p123
      $region26: #{tpu_custom_call.1} parent=11 // pred_check_branch
        %217 = sbr.rel (%p215) target = $region28
      $region27: #{tpu_custom_call.1} parent=11 // pred_region
        _
      $region28: #{tpu_custom_call.1} parent=11 // pred_fallthru
        _
      // Predicated region
      $region29: #{tpu_custom_call.1} parent=11 // pred_check
        %p218 = pneg %p144
      $region30: #{tpu_custom_call.1} parent=11 // pred_check_branch
        %220 = sbr.rel (%p218) target = $region32
      $region31: #{tpu_custom_call.1} parent=11 // pred_region
        _
      $region32: #{tpu_custom_call.1} parent=11 // pred_fallthru
        _
      // Predicated region
      $region33: #{tpu_custom_call.1} parent=11 // pred_check
        %p221 = pneg %p165
      $region34: #{tpu_custom_call.1} parent=11 // pred_check_branch
        %223 = sbr.rel (%p221) target = $region36
      $region35: #{tpu_custom_call.1} parent=11 // pred_region
        _
      $region36: #{tpu_custom_call.1} parent=11 // pred_fallthru
        _
    $region12: #{tpu_custom_call.1} parent=5 // pred_fallthru
      _
    %p224 = scmp.lt.s32.totalorder %s13, 2
    // Predicated region
    $region37: #{tpu_custom_call.1} parent=5 // pred_check
      %p225 = pneg %p224
    $region38: #{tpu_custom_call.1} parent=5 // pred_check_branch
      %227 = sbr.rel (%p225) target = $region40
    $region39: #{tpu_custom_call.1} parent=5 // pred_region
      // Predicated region
      $region41: #{tpu_custom_call.1} parent=39 // pred_check
        %p228 = pneg %p33
      $region42: #{tpu_custom_call.1} parent=39 // pred_check_branch
        %230 = sbr.rel (%p228) target = $region44
      $region43: #{tpu_custom_call.1} parent=39 // pred_region
        %s231 = smul.u32 19, %s13
        %p232 = scmp.lt.s32.totalorder %s231, 37
        %s233 = scalar_select %p232, %s231, 37
        %s234 = smul.addr %s233, 8
        %s235 = scalar_lea.vmem %s0, %s234
        %s236 = smul.u32 19, %s13
      $region44: #{tpu_custom_call.1} parent=39 // pred_fallthru
        _
    $region40: #{tpu_custom_call.1} parent=5 // pred_fallthru
      _
    %p237 = scmp.le.s32.totalorder 1, %s13
    %p238 = scmp.lt.s32.totalorder %s13, 3
    %p239 = pnand %p237, %p238
    %p240 = pneg %p239
    // Predicated region
    $region45: #{tpu_custom_call.1} parent=5 // pred_check
      _
    $region46: #{tpu_custom_call.1} parent=5 // pred_check_branch
      %242 = sbr.rel (%p239) target = $region48
    $region47: #{tpu_custom_call.1} parent=5 // pred_region
      %s243 = ssub.s32 %s13, 1
      %s244 = smul.u32 19, %s18
      %p245 = scmp.lt.s32.totalorder %s244, 37
      %s246 = scalar_select %p245, %s244, 37
      %s247 = smul.addr %s246, 8
      %s248 = scalar_lea.vmem %s0, %s247
      %p249 = pneg %p39
      %p250 = pneg %p36
      %p251 = pneg %p60
      %p252 = pneg %p57
      %p253 = pneg %p81
      %p254 = pneg %p78
      %p255 = pneg %p102
      %p256 = pneg %p99
      %p257 = pneg %p123
      %p258 = pneg %p120
      %p259 = pneg %p144
      %p260 = pneg %p141
      %p261 = pneg %p165
      %p262 = pneg %p162
      %p263 = pneg %p191
      %p264 = pneg %p188
      %s265 = smul.u32 19, %s18
      %p266 = scmp.lt.s32.totalorder %s265, 37
      %s267 = scalar_select %p266, %s265, 37
      %s268 = smul.addr %s267, 8
      %s269 = scalar_lea.vmem %s7, %s268
      %s270 = smul.u32 19, %s18
      %p271 = scmp.lt.s32.totalorder %s270, 37
      %s272 = scalar_select %p271, %s270, 37
      %s273 = smul.addr %s272, 8
      %s274 = scalar_lea.vmem %s0, %s273
      %s275 = smul.u32 19, %s18
      %s276 = smul.u32 19, %s18
      %p277 = scmp.lt.s32.totalorder %s276, 37
      %s278 = scalar_select %p277, %s276, 37
      %s279 = smul.addr %s278, 8
      %s280 = scalar_lea.vmem %s7, %s279
      %s281 = smul.u32 19, %s18
      %v282 = vld [vmem:[%s274] sm:$0xff]
      %v283 = vld [vmem:[%s274 + $0x8] sm:$0xff]
      %v284 = vld [vmem:[%s274 + $0x10] sm:$0xff]
      %v285 = vld [vmem:[%s274 + $0x18] sm:$0xff]
      %v286 = vld [vmem:[%s274 + $0x20] sm:$0xff]
      %v287 = vld [vmem:[%s274 + $0x28] sm:$0xff]
      %v288 = vld [vmem:[%s274 + $0x30] sm:$0xff]
      %v289 = vld [vmem:[%s274 + $0x38] sm:$0xff]
      %v290 = vld [vmem:[%s274 + $0x40] sm:$0xff]
      %v291 = vld [vmem:[%s274 + $0x48] sm:$0xff]
      %v292 = vld [vmem:[%s274 + $0x50] sm:$0xff]
      %v293 = vld [vmem:[%s274 + $0x58] sm:$0xff]
      %v294 = vld [vmem:[%s274 + $0x60] sm:$0xff]
      %v295 = vld [vmem:[%s274 + $0x68] sm:$0xff]
      %v296 = vld [vmem:[%s274 + $0x70] sm:$0xff]
      %v297 = vld [vmem:[%s274 + $0x78] sm:$0xff]
      %v298 = vld [vmem:[%s274 + $0x80] sm:$0xff]
      %v299 = vld [vmem:[%s274 + $0x88] sm:$0xff]
      %v300 = vld [vmem:[%s274 + $0x90] sm:$0xff]
      %v301 = vld [vmem:[%s1] sm:$0xff]
      %v302 = vld [vmem:[%s1 + $0x8] sm:$0xff]
      %v303 = vld [vmem:[%s1 + $0x10] sm:$0xff]
      %v304 = vld [vmem:[%s1 + $0x18] sm:$0xff]
      %vm305 = vcmask 261120
      %v307 = vsel %vm305, %v282, 0
      %v310 = vsel %vm305, %v283, 0
      %v313 = vsel %vm305, %v284, 0
      %v316 = vsel %vm305, %v285, 0
      %v319 = vsel %vm305, %v286, 0
      %v322 = vsel %vm305, %v287, 0
      %v325 = vsel %vm305, %v288, 0
      %v328 = vsel %vm305, %v289, 0
      %v331 = vsel %vm305, %v290, 0
      %v334 = vsel %vm305, %v291, 0
      %v337 = vsel %vm305, %v292, 0
      %v340 = vsel %vm305, %v293, 0
      %v343 = vsel %vm305, %v294, 0
      %v346 = vsel %vm305, %v295, 0
      %v349 = vsel %vm305, %v296, 0
      %v352 = vsel %vm305, %v297, 0
      %v355 = vsel %vm305, %v298, 0
      %v358 = vsel %vm305, %v299, 0
      %v361 = vsel %vm305, %v300, 0
      %363 = vmatprep.subr.mxu0 0.0
      %364 = vmatpush1.msra.mxu0 %v301
      %365 = vmatprep.subr.mxu0 0.0
      %366 = vmatpush1.msra.mxu0 %v302
      %367 = vmatprep.subr.mxu0 0.0
      %368 = vmatpush1.msra.mxu0 %v303
      %369 = vmatprep.subr.mxu0 0.0
      %370 = vmatpush1.msra.mxu0 %v304
      %371 = vmatprep.subr.mxu0 0.0
      %372 = vmatpush1.msra.mxu0 0.0
      %373 = vmatprep.subr.mxu0 0.0
      %374 = vmatpush1.msra.mxu0 0.0
      %375 = vmatprep.subr.mxu0 0.0
      %376 = vmatpush1.msra.mxu0 0.0
      %377 = vmatprep.subr.mxu0 0.0
      %378 = vmatpush1.msra.mxu0 0.0
      %379 = vmatprep.subr.mxu0 0.0
      %380 = vmatpush1.msra.mxu0 0.0
      %381 = vmatprep.subr.mxu0 0.0
      %382 = vmatpush1.msra.mxu0 0.0
      %383 = vmatprep.subr.mxu0 0.0
      %384 = vmatpush1.msra.mxu0 0.0
      %385 = vmatprep.subr.mxu0 0.0
      %386 = vmatpush1.msra.mxu0 0.0
      %387 = vmatprep.subr.mxu0 0.0
      %388 = vmatpush1.msra.mxu0 0.0
      %389 = vmatprep.subr.mxu0 0.0
      %390 = vmatpush1.msra.mxu0 0.0
      %391 = vmatprep.subr.mxu0 0.0
      %392 = vmatpush1.msra.mxu0 0.0
      %393 = vmatprep.subr.mxu0 0.0
      %394 = vmatpush1.msra.mxu0 0.0
      %395 = vmatprep.subr.mxu0 0.0
      %396 = vmatpush1.msra.mxu0 0.0
      %397 = vmatprep.subr.mxu0 0.0
      %398 = vmatpush1.msra.mxu0 0.0
      %399 = vmatprep.subr.mxu0 0.0
      %400 = vmatpush1.msra.mxu0 0.0
      %401 = vmatprep.subr.mxu0 0.0
      %402 = vmatpush1.msra.mxu0 0.0
      %403 = vmatprep.subr.mxu0 0.0
      %404 = vmatpush1.msra.mxu0 0.0
      %405 = vmatprep.subr.mxu0 0.0
      %406 = vmatpush1.msra.mxu0 0.0
      %407 = vmatprep.subr.mxu0 0.0
      %408 = vmatpush1.msra.mxu0 0.0
      %409 = vmatprep.subr.mxu0 0.0
      %410 = vmatpush1.msra.mxu0 0.0
      %411 = vmatprep.subr.mxu0 0.0
      %412 = vmatpush1.msra.mxu0 0.0
      %413 = vmatprep.subr.mxu0 0.0
      %414 = vmatpush1.msra.mxu0 0.0
      %415 = vmatprep.subr.mxu0 0.0
      %416 = vmatpush1.msra.mxu0 0.0
      %417 = vmatprep.subr.mxu0 0.0
      %418 = vmatpush1.msra.mxu0 0.0
      %419 = vmatprep.subr.mxu0 0.0
      %420 = vmatpush1.msra.mxu0 0.0
      %421 = vmatprep.subr.mxu0 0.0
      %422 = vmatpush1.msra.mxu0 0.0
      %423 = vmatprep.subr.mxu0 0.0
      %424 = vmatpush1.msra.mxu0 0.0
      %425 = vmatprep.subr.mxu0 0.0
      %426 = vmatpush1.msra.mxu0 0.0
      %427 = vmatprep.mubr.f32.mxu0 0.0
      %428 = vmatmul.mubr.f32.gmra.mrb[0].mxu0 %v307
      %v429 = vpop.f32.mrb[0].mxu0
      %v430 = vadd.f32 0.0, %v429
      %v431 = vpop.f32.mrb[0].mxu0
      %432 = vmatprep.mubr.f32.mxu0 0.0
      %433 = vmatmul.mubr.f32.gmra.mrb[0].mxu0 %v310
      %v434 = vpop.f32.mrb[0].mxu0
      %v435 = vadd.f32 0.0, %v434
      %v436 = vpop.f32.mrb[0].mxu0
      %437 = vmatprep.mubr.f32.mxu0 0.0
      %438 = vmatmul.mubr.f32.gmra.mrb[0].mxu0 %v313
      %v439 = vpop.f32.mrb[0].mxu0
      %v440 = vadd.f32 0.0, %v439
      %v441 = vpop.f32.mrb[0].mxu0
      %442 = vmatprep.mubr.f32.mxu0 0.0
      %443 = vmatmul.mubr.f32.gmra.mrb[0].mxu0 %v316
      %v444 = vpop.f32.mrb[0].mxu0
      %v445 = vadd.f32 0.0, %v444
      %v446 = vpop.f32.mrb[0].mxu0
      %447 = vmatprep.mubr.f32.mxu0 0.0
      %448 = vmatmul.mubr.f32.gmra.mrb[0].mxu0 %v319
      %v449 = vpop.f32.mrb[0].mxu0
      %v450 = vadd.f32 0.0, %v449
      %v451 = vpop.f32.mrb[0].mxu0
      %452 = vmatprep.mubr.f32.mxu0 0.0
      %453 = vmatmul.mubr.f32.gmra.mrb[0].mxu0 %v322
      %v454 = vpop.f32.mrb[0].mxu0
      %v455 = vadd.f32 0.0, %v454
      %v456 = vpop.f32.mrb[0].mxu0
      %457 = vmatprep.mubr.f32.mxu0 0.0
      %458 = vmatmul.mubr.f32.gmra.mrb[0].mxu0 %v325
      %v459 = vpop.f32.mrb[0].mxu0
      %v460 = vadd.f32 0.0, %v459
      %v461 = vpop.f32.mrb[0].mxu0
      %462 = vmatprep.mubr.f32.mxu0 0.0
      %463 = vmatmul.mubr.f32.gmra.mrb[0].mxu0 %v328
      %v464 = vpop.f32.mrb[0].mxu0
      %v465 = vadd.f32 0.0, %v464
      %v466 = vpop.f32.mrb[0].mxu0
      %467 = vmatprep.mubr.f32.mxu0 0.0
      %468 = vmatmul.mubr.f32.gmra.mrb[0].mxu0 %v331
      %v469 = vpop.f32.mrb[0].mxu0
      %v470 = vadd.f32 0.0, %v469
      %v471 = vpop.f32.mrb[0].mxu0
      %472 = vmatprep.mubr.f32.mxu0 0.0
      %473 = vmatmul.mubr.f32.gmra.mrb[0].mxu0 %v334
      %v474 = vpop.f32.mrb[0].mxu0
      %v475 = vadd.f32 0.0, %v474
      %v476 = vpop.f32.mrb[0].mxu0
      %477 = vmatprep.mubr.f32.mxu0 0.0
      %478 = vmatmul.mubr.f32.gmra.mrb[0].mxu0 %v337
      %v479 = vpop.f32.mrb[0].mxu0
      %v480 = vadd.f32 0.0, %v479
      %v481 = vpop.f32.mrb[0].mxu0
      %482 = vmatprep.mubr.f32.mxu0 0.0
      %483 = vmatmul.mubr.f32.gmra.mrb[0].mxu0 %v340
      %v484 = vpop.f32.mrb[0].mxu0
      %v485 = vadd.f32 0.0, %v484
      %v486 = vpop.f32.mrb[0].mxu0
      %487 = vmatprep.mubr.f32.mxu0 0.0
      %488 = vmatmul.mubr.f32.gmra.mrb[0].mxu0 %v343
      %v489 = vpop.f32.mrb[0].mxu0
      %v490 = vadd.f32 0.0, %v489
      %v491 = vpop.f32.mrb[0].mxu0
      %492 = vmatprep.mubr.f32.mxu0 0.0
      %493 = vmatmul.mubr.f32.gmra.mrb[0].mxu0 %v346
      %v494 = vpop.f32.mrb[0].mxu0
      %v495 = vadd.f32 0.0, %v494
      %v496 = vpop.f32.mrb[0].mxu0
      %497 = vmatprep.mubr.f32.mxu0 0.0
      %498 = vmatmul.mubr.f32.gmra.mrb[0].mxu0 %v349
      %v499 = vpop.f32.mrb[0].mxu0
      %v500 = vadd.f32 0.0, %v499
      %v501 = vpop.f32.mrb[0].mxu0
      %502 = vmatprep.mubr.f32.mxu0 0.0
      %503 = vmatmul.mubr.f32.gmra.mrb[0].mxu0 %v352
      %v504 = vpop.f32.mrb[0].mxu0
      %v505 = vadd.f32 0.0, %v504
      %v506 = vpop.f32.mrb[0].mxu0
      %507 = vmatprep.mubr.f32.mxu0 0.0
      %508 = vmatmul.mubr.f32.gmra.mrb[0].mxu0 %v355
      %v509 = vpop.f32.mrb[0].mxu0
      %v510 = vadd.f32 0.0, %v509
      %v511 = vpop.f32.mrb[0].mxu0
      %512 = vmatprep.mubr.f32.mxu0 0.0
      %513 = vmatmul.mubr.f32.gmra.mrb[0].mxu0 %v358
      %v514 = vpop.f32.mrb[0].mxu0
      %v515 = vadd.f32 0.0, %v514
      %v516 = vpop.f32.mrb[0].mxu0
      %517 = vmatprep.mubr.f32.mxu0 0.0
      %518 = vmatmul.mubr.f32.gmra.mrb[0].mxu0 %v361
      %v519 = vpop.f32.mrb[0].mxu0
      %v520 = vadd.f32 0.0, %v519
      %v521 = vpop.f32.mrb[0].mxu0
      %522 = vdwg.mxu0
      %523 = vadd.xlane.f32.xlu0 %v430
      %v524 = vpop.xlane.xlu0 %523
      %525 = vadd.xlane.f32.xlu0 %v435
      %v526 = vpop.xlane.xlu0 %525
      %527 = vadd.xlane.f32.xlu0 %v440
      %v528 = vpop.xlane.xlu0 %527
      %529 = vadd.xlane.f32.xlu0 %v445
      %v530 = vpop.xlane.xlu0 %529
      %531 = vadd.xlane.f32.xlu0 %v450
      %v532 = vpop.xlane.xlu0 %531
      %533 = vadd.xlane.f32.xlu0 %v455
      %v534 = vpop.xlane.xlu0 %533
      %535 = vadd.xlane.f32.xlu0 %v460
      %v536 = vpop.xlane.xlu0 %535
      %537 = vadd.xlane.f32.xlu0 %v465
      %v538 = vpop.xlane.xlu0 %537
      %539 = vadd.xlane.f32.xlu0 %v470
      %v540 = vpop.xlane.xlu0 %539
      %541 = vadd.xlane.f32.xlu0 %v475
      %v542 = vpop.xlane.xlu0 %541
      %543 = vadd.xlane.f32.xlu0 %v480
      %v544 = vpop.xlane.xlu0 %543
      %545 = vadd.xlane.f32.xlu0 %v485
      %v546 = vpop.xlane.xlu0 %545
      %547 = vadd.xlane.f32.xlu0 %v490
      %v548 = vpop.xlane.xlu0 %547
      %549 = vadd.xlane.f32.xlu0 %v495
      %v550 = vpop.xlane.xlu0 %549
      %551 = vadd.xlane.f32.xlu0 %v500
      %v552 = vpop.xlane.xlu0 %551
      %553 = vadd.xlane.f32.xlu0 %v505
      %v554 = vpop.xlane.xlu0 %553
      %555 = vadd.xlane.f32.xlu0 %v510
      %v556 = vpop.xlane.xlu0 %555
      %557 = vadd.xlane.f32.xlu0 %v515
      %v558 = vpop.xlane.xlu0 %557
      %559 = vadd.xlane.f32.xlu0 %v520
      %v560 = vpop.xlane.xlu0 %559
      %v561 = vmul.f32 %v524, 0.125
      %v562 = vmul.f32 %v526, 0.125
      %v563 = vmul.f32 %v528, 0.125
      %v564 = vmul.f32 %v530, 0.125
      %v565 = vmul.f32 %v532, 0.125
      %v566 = vmul.f32 %v534, 0.125
      %v567 = vmul.f32 %v536, 0.125
      %v568 = vmul.f32 %v538, 0.125
      %v569 = vmul.f32 %v540, 0.125
      %v570 = vmul.f32 %v542, 0.125
      %v571 = vmul.f32 %v544, 0.125
      %v572 = vmul.f32 %v546, 0.125
      %v573 = vmul.f32 %v548, 0.125
      %v574 = vmul.f32 %v550, 0.125
      %v575 = vmul.f32 %v552, 0.125
      %v576 = vmul.f32 %v554, 0.125
      %v577 = vmul.f32 %v556, 0.125
      %v578 = vmul.f32 %v558, 0.125
      %v579 = vmul.f32 %v560, 0.125
      %v580 = vsub.f32 %v430, %v561
      %v581 = vsub.f32 %v435, %v562
      %v582 = vsub.f32 %v440, %v563
      %v583 = vsub.f32 %v445, %v564
      %v584 = vsub.f32 %v450, %v565
      %v585 = vsub.f32 %v455, %v566
      %v586 = vsub.f32 %v460, %v567
      %v587 = vsub.f32 %v465, %v568
      %v588 = vsub.f32 %v470, %v569
      %v589 = vsub.f32 %v475, %v570
      %v590 = vsub.f32 %v480, %v571
      %v591 = vsub.f32 %v485, %v572
      %v592 = vsub.f32 %v490, %v573
      %v593 = vsub.f32 %v495, %v574
      %v594 = vsub.f32 %v500, %v575
      %v595 = vsub.f32 %v505, %v576
      %v596 = vsub.f32 %v510, %v577
      %v597 = vsub.f32 %v515, %v578
      %v598 = vsub.f32 %v520, %v579
      %v599 = vlaneseq
      %v600 = vand.u32 %v599, 127
      %vm601 = vcmp.lt.s32.totalorder %v600, 8
      %v602 = vsel %vm601, 1, 0
      %vm603 = vcmp.eq.s32.totalorder %v602, 1
      %v604 = vsel %vm603, %v580, 0.0
      %v605 = vsel %vm603, %v581, 0.0
      %v606 = vsel %vm603, %v582, 0.0
      %v607 = vsel %vm603, %v583, 0.0
      %v608 = vsel %vm603, %v584, 0.0
      %v609 = vsel %vm603, %v585, 0.0
      %v610 = vsel %vm603, %v586, 0.0
      %v611 = vsel %vm603, %v587, 0.0
      %v612 = vsel %vm603, %v588, 0.0
      %v613 = vsel %vm603, %v589, 0.0
      %v614 = vsel %vm603, %v590, 0.0
      %v615 = vsel %vm603, %v591, 0.0
      %v616 = vsel %vm603, %v592, 0.0
      %v617 = vsel %vm603, %v593, 0.0
      %v618 = vsel %vm603, %v594, 0.0
      %v619 = vsel %vm603, %v595, 0.0
      %v620 = vsel %vm603, %v596, 0.0
      %v621 = vsel %vm603, %v597, 0.0
      %v622 = vsel %vm603, %v598, 0.0
      %v623 = vmul.f32 %v604, %v604
      %v624 = vmul.f32 %v605, %v605
      %v625 = vmul.f32 %v606, %v606
      %v626 = vmul.f32 %v607, %v607
      %v627 = vmul.f32 %v608, %v608
      %v628 = vmul.f32 %v609, %v609
      %v629 = vmul.f32 %v610, %v610
      %v630 = vmul.f32 %v611, %v611
      %v631 = vmul.f32 %v612, %v612
      %v632 = vmul.f32 %v613, %v613
      %v633 = vmul.f32 %v614, %v614
      %v634 = vmul.f32 %v615, %v615
      %v635 = vmul.f32 %v616, %v616
      %v636 = vmul.f32 %v617, %v617
      %v637 = vmul.f32 %v618, %v618
      %v638 = vmul.f32 %v619, %v619
      %v639 = vmul.f32 %v620, %v620
      %v640 = vmul.f32 %v621, %v621
      %v641 = vmul.f32 %v622, %v622
      %642 = vadd.xlane.f32.xlu0 %v623
      %v643 = vpop.xlane.xlu0 %642
      %644 = vadd.xlane.f32.xlu0 %v624
      %v645 = vpop.xlane.xlu0 %644
      %646 = vadd.xlane.f32.xlu0 %v625
      %v647 = vpop.xlane.xlu0 %646
      %648 = vadd.xlane.f32.xlu0 %v626
      %v649 = vpop.xlane.xlu0 %648
      %650 = vadd.xlane.f32.xlu0 %v627
      %v651 = vpop.xlane.xlu0 %650
      %652 = vadd.xlane.f32.xlu0 %v628
      %v653 = vpop.xlane.xlu0 %652
      %654 = vadd.xlane.f32.xlu0 %v629
      %v655 = vpop.xlane.xlu0 %654
      %656 = vadd.xlane.f32.xlu0 %v630
      %v657 = vpop.xlane.xlu0 %656
      %658 = vadd.xlane.f32.xlu0 %v631
      %v659 = vpop.xlane.xlu0 %658
      %660 = vadd.xlane.f32.xlu0 %v632
      %v661 = vpop.xlane.xlu0 %660
      %662 = vadd.xlane.f32.xlu0 %v633
      %v663 = vpop.xlane.xlu0 %662
      %664 = vadd.xlane.f32.xlu0 %v634
      %v665 = vpop.xlane.xlu0 %664
      %666 = vadd.xlane.f32.xlu0 %v635
      %v667 = vpop.xlane.xlu0 %666
      %668 = vadd.xlane.f32.xlu0 %v636
      %v669 = vpop.xlane.xlu0 %668
      %670 = vadd.xlane.f32.xlu0 %v637
      %v671 = vpop.xlane.xlu0 %670
      %672 = vadd.xlane.f32.xlu0 %v638
      %v673 = vpop.xlane.xlu0 %672
      %674 = vadd.xlane.f32.xlu0 %v639
      %v675 = vpop.xlane.xlu0 %674
      %676 = vadd.xlane.f32.xlu0 %v640
      %v677 = vpop.xlane.xlu0 %676
      %678 = vadd.xlane.f32.xlu0 %v641
      %v679 = vpop.xlane.xlu0 %678
      %v680 = vmul.f32 %v643, 0.125
      %v681 = vmul.f32 %v645, 0.125
      %v682 = vmul.f32 %v647, 0.125
      %v683 = vmul.f32 %v649, 0.125
      %v684 = vmul.f32 %v651, 0.125
      %v685 = vmul.f32 %v653, 0.125
      %v686 = vmul.f32 %v655, 0.125
      %v687 = vmul.f32 %v657, 0.125
      %v688 = vmul.f32 %v659, 0.125
      %v689 = vmul.f32 %v661, 0.125
      %v690 = vmul.f32 %v663, 0.125
      %v691 = vmul.f32 %v665, 0.125
      %v692 = vmul.f32 %v667, 0.125
      %v693 = vmul.f32 %v669, 0.125
      %v694 = vmul.f32 %v671, 0.125
      %v695 = vmul.f32 %v673, 0.125
      %v696 = vmul.f32 %v675, 0.125
      %v697 = vmul.f32 %v677, 0.125
      %v698 = vmul.f32 %v679, 0.125
      %v699 = vadd.f32 %v680, 1e-05
      %v700 = vadd.f32 %v681, 1e-05
      %v701 = vadd.f32 %v682, 1e-05
      %v702 = vadd.f32 %v683, 1e-05
      %v703 = vadd.f32 %v684, 1e-05
      %v704 = vadd.f32 %v685, 1e-05
      %v705 = vadd.f32 %v686, 1e-05
      %v706 = vadd.f32 %v687, 1e-05
      %v707 = vadd.f32 %v688, 1e-05
      %v708 = vadd.f32 %v689, 1e-05
      %v709 = vadd.f32 %v690, 1e-05
      %v710 = vadd.f32 %v691, 1e-05
      %v711 = vadd.f32 %v692, 1e-05
      %v712 = vadd.f32 %v693, 1e-05
      %v713 = vadd.f32 %v694, 1e-05
      %v714 = vadd.f32 %v695, 1e-05
      %v715 = vadd.f32 %v696, 1e-05
      %v716 = vadd.f32 %v697, 1e-05
      %v717 = vadd.f32 %v698, 1e-05
      %v718 = vrsqrt.pop %v699
      %v719 = vrsqrt.pop %v700
      %v720 = vrsqrt.pop %v701
      %v721 = vrsqrt.pop %v702
      %v722 = vrsqrt.pop %v703
      %v723 = vrsqrt.pop %v704
      %v724 = vrsqrt.pop %v705
      %v725 = vrsqrt.pop %v706
      %v726 = vrsqrt.pop %v707
      %v727 = vrsqrt.pop %v708
      %v728 = vrsqrt.pop %v709
      %v729 = vrsqrt.pop %v710
      %v730 = vrsqrt.pop %v711
      %v731 = vrsqrt.pop %v712
      %v732 = vrsqrt.pop %v713
      %v733 = vrsqrt.pop %v714
      %v734 = vrsqrt.pop %v715
      %v735 = vrsqrt.pop %v716
      %v736 = vrsqrt.pop %v717
      %v737 = vmul.f32 %v604, %v718
      %v738 = vmul.f32 %v605, %v719
      %v739 = vmul.f32 %v606, %v720
      %v740 = vmul.f32 %v607, %v721
      %v741 = vmul.f32 %v608, %v722
      %v742 = vmul.f32 %v609, %v723
      %v743 = vmul.f32 %v610, %v724
      %v744 = vmul.f32 %v611, %v725
      %v745 = vmul.f32 %v612, %v726
      %v746 = vmul.f32 %v613, %v727
      %v747 = vmul.f32 %v614, %v728
      %v748 = vmul.f32 %v615, %v729
      %v749 = vmul.f32 %v616, %v730
      %v750 = vmul.f32 %v617, %v731
      %v751 = vmul.f32 %v618, %v732
      %v752 = vmul.f32 %v619, %v733
      %v753 = vmul.f32 %v620, %v734
      %v754 = vmul.f32 %v621, %v735
      %v755 = vmul.f32 %v622, %v736
      %v756 = vld [vmem:[%s2] sm:$0x1]
      %v758 = vlaneseq
      %v759 = vshrl.u32 %v758, 7
      %v760 = vsub.s32 0, %v759
      %v761 = vrot.slane %v756, %v760
      %v763 = vmul.f32 %v737, %v761
      %v764 = vmul.f32 %v738, %v761
      %v765 = vmul.f32 %v739, %v761
      %v766 = vmul.f32 %v740, %v761
      %v767 = vmul.f32 %v741, %v761
      %v768 = vmul.f32 %v742, %v761
      %v769 = vmul.f32 %v743, %v761
      %v770 = vmul.f32 %v744, %v761
      %v771 = vmul.f32 %v745, %v761
      %v772 = vmul.f32 %v746, %v761
      %v773 = vmul.f32 %v747, %v761
      %v774 = vmul.f32 %v748, %v761
      %v775 = vmul.f32 %v749, %v761
      %v776 = vmul.f32 %v750, %v761
      %v777 = vmul.f32 %v751, %v761
      %v778 = vmul.f32 %v752, %v761
      %v779 = vmul.f32 %v753, %v761
      %v780 = vmul.f32 %v754, %v761
      %v781 = vmul.f32 %v755, %v761
      %v782 = vld [vmem:[%s3] sm:$0x1]
      %v784 = vlaneseq
      %v785 = vshrl.u32 %v784, 7
      %v786 = vsub.s32 0, %v785
      %v787 = vrot.slane %v782, %v786
      %v789 = vadd.f32 %v763, %v787
      %v790 = vadd.f32 %v764, %v787
      %v791 = vadd.f32 %v765, %v787
      %v792 = vadd.f32 %v766, %v787
      %v793 = vadd.f32 %v767, %v787
      %v794 = vadd.f32 %v768, %v787
      %v795 = vadd.f32 %v769, %v787
      %v796 = vadd.f32 %v770, %v787
      %v797 = vadd.f32 %v771, %v787
      %v798 = vadd.f32 %v772, %v787
      %v799 = vadd.f32 %v773, %v787
      %v800 = vadd.f32 %v774, %v787
      %v801 = vadd.f32 %v775, %v787
      %v802 = vadd.f32 %v776, %v787
      %v803 = vadd.f32 %v777, %v787
      %v804 = vadd.f32 %v778, %v787
      %v805 = vadd.f32 %v779, %v787
      %v806 = vadd.f32 %v780, %v787
      %v807 = vadd.f32 %v781, %v787
      %v808 = vld [vmem:[%s4] sm:$0xff]
      %v809 = vld [vmem:[%s4 + $0x8] sm:$0xff]
      %v810 = vld [vmem:[%s4 + $0x10] sm:$0xff]
      %v811 = vld [vmem:[%s4 + $0x18] sm:$0xff]
      %v812 = vld [vmem:[%s4 + $0x20] sm:$0xff]
      %v813 = vld [vmem:[%s4 + $0x28] sm:$0xff]
      %v814 = vld [vmem:[%s4 + $0x30] sm:$0xff]
      %v815 = vld [vmem:[%s4 + $0x38] sm:$0xff]
      %v816 = vld [vmem:[%s4 + $0x40] sm:$0xff]
      %v817 = vld [vmem:[%s4 + $0x48] sm:$0xff]
      %v818 = vld [vmem:[%s4 + $0x50] sm:$0xff]
      %v819 = vld [vmem:[%s4 + $0x58] sm:$0xff]
      %v820 = vld [vmem:[%s4 + $0x60] sm:$0xff]
      %v821 = vld [vmem:[%s4 + $0x68] sm:$0xff]
      %v822 = vld [vmem:[%s4 + $0x70] sm:$0xff]
      %v823 = vld [vmem:[%s4 + $0x78] sm:$0xff]
      %824 = vmatprep.subr.mxu0 0.0
      %825 = vmatpush1.msra.mxu0 %v808
      %826 = vmatprep.subr.mxu0 0.0
      %827 = vmatpush1.msra.mxu0 %v809
      %828 = vmatprep.subr.mxu0 0.0
      %829 = vmatpush1.msra.mxu0 %v810
      %830 = vmatprep.subr.mxu0 0.0
      %831 = vmatpush1.msra.mxu0 %v811
      %832 = vmatprep.subr.mxu0 0.0
      %833 = vmatpush1.msra.mxu0 %v812
      %834 = vmatprep.subr.mxu0 0.0
      %835 = vmatpush1.msra.mxu0 %v813
      %836 = vmatprep.subr.mxu0 0.0
      %837 = vmatpush1.msra.mxu0 %v814
      %838 = vmatprep.subr.mxu0 0.0
      %839 = vmatpush1.msra.mxu0 %v815
      %840 = vmatprep.subr.mxu0 0.0
      %841 = vmatpush1.msra.mxu0 %v816
      %842 = vmatprep.subr.mxu0 0.0
      %843 = vmatpush1.msra.mxu0 %v817
      %844 = vmatprep.subr.mxu0 0.0
      %845 = vmatpush1.msra.mxu0 %v818
      %846 = vmatprep.subr.mxu0 0.0
      %847 = vmatpush1.msra.mxu0 %v819
      %848 = vmatprep.subr.mxu0 0.0
      %849 = vmatpush1.msra.mxu0 %v820
      %850 = vmatprep.subr.mxu0 0.0
      %851 = vmatpush1.msra.mxu0 %v821
      %852 = vmatprep.subr.mxu0 0.0
      %853 = vmatpush1.msra.mxu0 %v822
      %854 = vmatprep.subr.mxu0 0.0
      %855 = vmatpush1.msra.mxu0 %v823
      %856 = vmatprep.subr.mxu0 0.0
      %857 = vmatpush1.msra.mxu0 0.0
      %858 = vmatprep.subr.mxu0 0.0
      %859 = vmatpush1.msra.mxu0 0.0
      %860 = vmatprep.subr.mxu0 0.0
      %861 = vmatpush1.msra.mxu0 0.0
      %862 = vmatprep.subr.mxu0 0.0
      %863 = vmatpush1.msra.mxu0 0.0
      %864 = vmatprep.subr.mxu0 0.0
      %865 = vmatpush1.msra.mxu0 0.0
      %866 = vmatprep.subr.mxu0 0.0
      %867 = vmatpush1.msra.mxu0 0.0
      %868 = vmatprep.subr.mxu0 0.0
      %869 = vmatpush1.msra.mxu0 0.0
      %870 = vmatprep.subr.mxu0 0.0
      %871 = vmatpush1.msra.mxu0 0.0
      %872 = vmatprep.subr.mxu0 0.0
      %873 = vmatpush1.msra.mxu0 0.0
      %874 = vmatprep.subr.mxu0 0.0
      %875 = vmatpush1.msra.mxu0 0.0
      %876 = vmatprep.subr.mxu0 0.0
      %877 = vmatpush1.msra.mxu0 0.0
      %878 = vmatprep.subr.mxu0 0.0
      %879 = vmatpush1.msra.mxu0 0.0
      %880 = vmatprep.subr.mxu0 0.0
      %881 = vmatpush1.msra.mxu0 0.0
      %882 = vmatprep.subr.mxu0 0.0
      %883 = vmatpush1.msra.mxu0 0.0
      %884 = vmatprep.subr.mxu0 0.0
      %885 = vmatpush1.msra.mxu0 0.0
      %886 = vmatprep.subr.mxu0 0.0
      %887 = vmatpush1.msra.mxu0 0.0
      %888 = vmatprep.mubr.f32.mxu0 0.0
      %889 = vmatmul.mubr.f32.gmra.mrb[0].mxu0 %v789
      %v890 = vpop.f32.mrb[0].mxu0
      %v891 = vadd.f32 0.0, %v890
      %v892 = vpop.f32.mrb[0].mxu0
      %893 = vmatprep.mubr.f32.mxu0 0.0
      %894 = vmatmul.mubr.f32.gmra.mrb[0].mxu0 %v790
      %v895 = vpop.f32.mrb[0].mxu0
      %v896 = vadd.f32 0.0, %v895
      %v897 = vpop.f32.mrb[0].mxu0
      %898 = vmatprep.mubr.f32.mxu0 0.0
      %899 = vmatmul.mubr.f32.gmra.mrb[0].mxu0 %v791
      %v900 = vpop.f32.mrb[0].mxu0
      %v901 = vadd.f32 0.0, %v900
      %v902 = vpop.f32.mrb[0].mxu0
      %903 = vmatprep.mubr.f32.mxu0 0.0
      %904 = vmatmul.mubr.f32.gmra.mrb[0].mxu0 %v792
      %v905 = vpop.f32.mrb[0].mxu0
      %v906 = vadd.f32 0.0, %v905
      %v907 = vpop.f32.mrb[0].mxu0
      %908 = vmatprep.mubr.f32.mxu0 0.0
      %909 = vmatmul.mubr.f32.gmra.mrb[0].mxu0 %v793
      %v910 = vpop.f32.mrb[0].mxu0
      %v911 = vadd.f32 0.0, %v910
      %v912 = vpop.f32.mrb[0].mxu0
      %913 = vmatprep.mubr.f32.mxu0 0.0
      %914 = vmatmul.mubr.f32.gmra.mrb[0].mxu0 %v794
      %v915 = vpop.f32.mrb[0].mxu0
      %v916 = vadd.f32 0.0, %v915
      %v917 = vpop.f32.mrb[0].mxu0
      %918 = vmatprep.mubr.f32.mxu0 0.0
      %919 = vmatmul.mubr.f32.gmra.mrb[0].mxu0 %v795
      %v920 = vpop.f32.mrb[0].mxu0
      %v921 = vadd.f32 0.0, %v920
      %v922 = vpop.f32.mrb[0].mxu0
      %923 = vmatprep.mubr.f32.mxu0 0.0
      %924 = vmatmul.mubr.f32.gmra.mrb[0].mxu0 %v796
      %v925 = vpop.f32.mrb[0].mxu0
      %v926 = vadd.f32 0.0, %v925
      %v927 = vpop.f32.mrb[0].mxu0
      %928 = vmatprep.mubr.f32.mxu0 0.0
      %929 = vmatmul.mubr.f32.gmra.mrb[0].mxu0 %v797
      %v930 = vpop.f32.mrb[0].mxu0
      %v931 = vadd.f32 0.0, %v930
      %v932 = vpop.f32.mrb[0].mxu0
      %933 = vmatprep.mubr.f32.mxu0 0.0
      %934 = vmatmul.mubr.f32.gmra.mrb[0].mxu0 %v798
      %v935 = vpop.f32.mrb[0].mxu0
      %v936 = vadd.f32 0.0, %v935
      %v937 = vpop.f32.mrb[0].mxu0
      %938 = vmatprep.mubr.f32.mxu0 0.0
      %939 = vmatmul.mubr.f32.gmra.mrb[0].mxu0 %v799
      %v940 = vpop.f32.mrb[0].mxu0
      %v941 = vadd.f32 0.0, %v940
      %v942 = vpop.f32.mrb[0].mxu0
      %943 = vmatprep.mubr.f32.mxu0 0.0
      %944 = vmatmul.mubr.f32.gmra.mrb[0].mxu0 %v800
      %v945 = vpop.f32.mrb[0].mxu0
      %v946 = vadd.f32 0.0, %v945
      %v947 = vpop.f32.mrb[0].mxu0
      %948 = vmatprep.mubr.f32.mxu0 0.0
      %949 = vmatmul.mubr.f32.gmra.mrb[0].mxu0 %v801
      %v950 = vpop.f32.mrb[0].mxu0
      %v951 = vadd.f32 0.0, %v950
      %v952 = vpop.f32.mrb[0].mxu0
      %953 = vmatprep.mubr.f32.mxu0 0.0
      %954 = vmatmul.mubr.f32.gmra.mrb[0].mxu0 %v802
      %v955 = vpop.f32.mrb[0].mxu0
      %v956 = vadd.f32 0.0, %v955
      %v957 = vpop.f32.mrb[0].mxu0
      %958 = vmatprep.mubr.f32.mxu0 0.0
      %959 = vmatmul.mubr.f32.gmra.mrb[0].mxu0 %v803
      %v960 = vpop.f32.mrb[0].mxu0
      %v961 = vadd.f32 0.0, %v960
      %v962 = vpop.f32.mrb[0].mxu0
      %963 = vmatprep.mubr.f32.mxu0 0.0
      %964 = vmatmul.mubr.f32.gmra.mrb[0].mxu0 %v804
      %v965 = vpop.f32.mrb[0].mxu0
      %v966 = vadd.f32 0.0, %v965
      %v967 = vpop.f32.mrb[0].mxu0
      %968 = vmatprep.mubr.f32.mxu0 0.0
      %969 = vmatmul.mubr.f32.gmra.mrb[0].mxu0 %v805
      %v970 = vpop.f32.mrb[0].mxu0
      %v971 = vadd.f32 0.0, %v970
      %v972 = vpop.f32.mrb[0].mxu0
      %973 = vmatprep.mubr.f32.mxu0 0.0
      %974 = vmatmul.mubr.f32.gmra.mrb[0].mxu0 %v806
      %v975 = vpop.f32.mrb[0].mxu0
      %v976 = vadd.f32 0.0, %v975
      %v977 = vpop.f32.mrb[0].mxu0
      %978 = vmatprep.mubr.f32.mxu0 0.0
      %979 = vmatmul.mubr.f32.gmra.mrb[0].mxu0 %v807
      %v980 = vpop.f32.mrb[0].mxu0
      %v981 = vadd.f32 0.0, %v980
      %v982 = vpop.f32.mrb[0].mxu0
      %983 = vdwg.mxu0
      %v984 = vsel %vm305, %v891, 0.0
      %985 = vadd.xlane.f32.xlu0 %v984
      %v986 = vpop.xlane.xlu0 %985
      %v987 = vsel %vm305, %v896, 0.0
      %988 = vadd.xlane.f32.xlu0 %v987
      %v989 = vpop.xlane.xlu0 %988
      %v990 = vsel %vm305, %v901, 0.0
      %991 = vadd.xlane.f32.xlu0 %v990
      %v992 = vpop.xlane.xlu0 %991
      %v993 = vsel %vm305, %v906, 0.0
      %994 = vadd.xlane.f32.xlu0 %v993
      %v995 = vpop.xlane.xlu0 %994
      %v996 = vsel %vm305, %v911, 0.0
      %997 = vadd.xlane.f32.xlu0 %v996
      %v998 = vpop.xlane.xlu0 %997
      %v999 = vsel %vm305, %v916, 0.0
      %1000 = vadd.xlane.f32.xlu0 %v999
      %v1001 = vpop.xlane.xlu0 %1000
      %v1002 = vsel %vm305, %v921, 0.0
      %1003 = vadd.xlane.f32.xlu0 %v1002
      %v1004 = vpop.xlane.xlu0 %1003
      %v1005 = vsel %vm305, %v926, 0.0
      %1006 = vadd.xlane.f32.xlu0 %v1005
      %v1007 = vpop.xlane.xlu0 %1006
      %v1008 = vsel %vm305, %v931, 0.0
      %1009 = vadd.xlane.f32.xlu0 %v1008
      %v1010 = vpop.xlane.xlu0 %1009
      %v1011 = vsel %vm305, %v936, 0.0
      %1012 = vadd.xlane.f32.xlu0 %v1011
      %v1013 = vpop.xlane.xlu0 %1012
      %v1014 = vsel %vm305, %v941, 0.0
      %1015 = vadd.xlane.f32.xlu0 %v1014
      %v1016 = vpop.xlane.xlu0 %1015
      %v1017 = vsel %vm305, %v946, 0.0
      %1018 = vadd.xlane.f32.xlu0 %v1017
      %v1019 = vpop.xlane.xlu0 %1018
      %v1020 = vsel %vm305, %v951, 0.0
      %1021 = vadd.xlane.f32.xlu0 %v1020
      %v1022 = vpop.xlane.xlu0 %1021
      %v1023 = vsel %vm305, %v956, 0.0
      %1024 = vadd.xlane.f32.xlu0 %v1023
      %v1025 = vpop.xlane.xlu0 %1024
      %v1026 = vsel %vm305, %v961, 0.0
      %1027 = vadd.xlane.f32.xlu0 %v1026
      %v1028 = vpop.xlane.xlu0 %1027
      %v1029 = vsel %vm305, %v966, 0.0
      %1030 = vadd.xlane.f32.xlu0 %v1029
      %v1031 = vpop.xlane.xlu0 %1030
      %v1032 = vsel %vm305, %v971, 0.0
      %1033 = vadd.xlane.f32.xlu0 %v1032
      %v1034 = vpop.xlane.xlu0 %1033
      %v1035 = vsel %vm305, %v976, 0.0
      %1036 = vadd.xlane.f32.xlu0 %v1035
      %v1037 = vpop.xlane.xlu0 %1036
      %v1038 = vsel %vm305, %v981, 0.0
      %1039 = vadd.xlane.f32.xlu0 %v1038
      %v1040 = vpop.xlane.xlu0 %1039
      %v1041 = vmul.f32 %v986, 0.03125
      %v1042 = vmul.f32 %v989, 0.03125
      %v1043 = vmul.f32 %v992, 0.03125
      %v1044 = vmul.f32 %v995, 0.03125
      %v1045 = vmul.f32 %v998, 0.03125
      %v1046 = vmul.f32 %v1001, 0.03125
      %v1047 = vmul.f32 %v1004, 0.03125
      %v1048 = vmul.f32 %v1007, 0.03125
      %v1049 = vmul.f32 %v1010, 0.03125
      %v1050 = vmul.f32 %v1013, 0.03125
      %v1051 = vmul.f32 %v1016, 0.03125
      %v1052 = vmul.f32 %v1019, 0.03125
      %v1053 = vmul.f32 %v1022, 0.03125
      %v1054 = vmul.f32 %v1025, 0.03125
      %v1055 = vmul.f32 %v1028, 0.03125
      %v1056 = vmul.f32 %v1031, 0.03125
      %v1057 = vmul.f32 %v1034, 0.03125
      %v1058 = vmul.f32 %v1037, 0.03125
      %v1059 = vmul.f32 %v1040, 0.03125
      %v1060 = vsub.f32 %v891, %v1041
      %v1061 = vsub.f32 %v896, %v1042
      %v1062 = vsub.f32 %v901, %v1043
      %v1063 = vsub.f32 %v906, %v1044
      %v1064 = vsub.f32 %v911, %v1045
      %v1065 = vsub.f32 %v916, %v1046
      %v1066 = vsub.f32 %v921, %v1047
      %v1067 = vsub.f32 %v926, %v1048
      %v1068 = vsub.f32 %v931, %v1049
      %v1069 = vsub.f32 %v936, %v1050
      %v1070 = vsub.f32 %v941, %v1051
      %v1071 = vsub.f32 %v946, %v1052
      %v1072 = vsub.f32 %v951, %v1053
      %v1073 = vsub.f32 %v956, %v1054
      %v1074 = vsub.f32 %v961, %v1055
      %v1075 = vsub.f32 %v966, %v1056
      %v1076 = vsub.f32 %v971, %v1057
      %v1077 = vsub.f32 %v976, %v1058
      %v1078 = vsub.f32 %v981, %v1059
      %v1079 = vmul.f32 %v1060, %v1060
      %v1080 = vmul.f32 %v1061, %v1061
      %v1081 = vmul.f32 %v1062, %v1062
      %v1082 = vmul.f32 %v1063, %v1063
      %v1083 = vmul.f32 %v1064, %v1064
      %v1084 = vmul.f32 %v1065, %v1065
      %v1085 = vmul.f32 %v1066, %v1066
      %v1086 = vmul.f32 %v1067, %v1067
      %v1087 = vmul.f32 %v1068, %v1068
      %v1088 = vmul.f32 %v1069, %v1069
      %v1089 = vmul.f32 %v1070, %v1070
      %v1090 = vmul.f32 %v1071, %v1071
      %v1091 = vmul.f32 %v1072, %v1072
      %v1092 = vmul.f32 %v1073, %v1073
      %v1093 = vmul.f32 %v1074, %v1074
      %v1094 = vmul.f32 %v1075, %v1075
      %v1095 = vmul.f32 %v1076, %v1076
      %v1096 = vmul.f32 %v1077, %v1077
      %v1097 = vmul.f32 %v1078, %v1078
      %v1098 = vsel %vm305, %v1079, 0.0
      %1099 = vadd.xlane.f32.xlu0 %v1098
      %v1100 = vpop.xlane.xlu0 %1099
      %v1101 = vsel %vm305, %v1080, 0.0
      %1102 = vadd.xlane.f32.xlu0 %v1101
      %v1103 = vpop.xlane.xlu0 %1102
      %v1104 = vsel %vm305, %v1081, 0.0
      %1105 = vadd.xlane.f32.xlu0 %v1104
      %v1106 = vpop.xlane.xlu0 %1105
      %v1107 = vsel %vm305, %v1082, 0.0
      %1108 = vadd.xlane.f32.xlu0 %v1107
      %v1109 = vpop.xlane.xlu0 %1108
      %v1110 = vsel %vm305, %v1083, 0.0
      %1111 = vadd.xlane.f32.xlu0 %v1110
      %v1112 = vpop.xlane.xlu0 %1111
      %v1113 = vsel %vm305, %v1084, 0.0
      %1114 = vadd.xlane.f32.xlu0 %v1113
      %v1115 = vpop.xlane.xlu0 %1114
      %v1116 = vsel %vm305, %v1085, 0.0
      %1117 = vadd.xlane.f32.xlu0 %v1116
      %v1118 = vpop.xlane.xlu0 %1117
      %v1119 = vsel %vm305, %v1086, 0.0
      %1120 = vadd.xlane.f32.xlu0 %v1119
      %v1121 = vpop.xlane.xlu0 %1120
      %v1122 = vsel %vm305, %v1087, 0.0
      %1123 = vadd.xlane.f32.xlu0 %v1122
      %v1124 = vpop.xlane.xlu0 %1123
      %v1125 = vsel %vm305, %v1088, 0.0
      %1126 = vadd.xlane.f32.xlu0 %v1125
      %v1127 = vpop.xlane.xlu0 %1126
      %v1128 = vsel %vm305, %v1089, 0.0
      %1129 = vadd.xlane.f32.xlu0 %v1128
      %v1130 = vpop.xlane.xlu0 %1129
      %v1131 = vsel %vm305, %v1090, 0.0
      %1132 = vadd.xlane.f32.xlu0 %v1131
      %v1133 = vpop.xlane.xlu0 %1132
      %v1134 = vsel %vm305, %v1091, 0.0
      %1135 = vadd.xlane.f32.xlu0 %v1134
      %v1136 = vpop.xlane.xlu0 %1135
      %v1137 = vsel %vm305, %v1092, 0.0
      %1138 = vadd.xlane.f32.xlu0 %v1137
      %v1139 = vpop.xlane.xlu0 %1138
      %v1140 = vsel %vm305, %v1093, 0.0
      %1141 = vadd.xlane.f32.xlu0 %v1140
      %v1142 = vpop.xlane.xlu0 %1141
      %v1143 = vsel %vm305, %v1094, 0.0
      %1144 = vadd.xlane.f32.xlu0 %v1143
      %v1145 = vpop.xlane.xlu0 %1144
      %v1146 = vsel %vm305, %v1095, 0.0
      %1147 = vadd.xlane.f32.xlu0 %v1146
      %v1148 = vpop.xlane.xlu0 %1147
      %v1149 = vsel %vm305, %v1096, 0.0
      %1150 = vadd.xlane.f32.xlu0 %v1149
      %v1151 = vpop.xlane.xlu0 %1150
      %v1152 = vsel %vm305, %v1097, 0.0
      %1153 = vadd.xlane.f32.xlu0 %v1152
      %v1154 = vpop.xlane.xlu0 %1153
      %v1155 = vmul.f32 %v1100, 0.03125
      %v1156 = vmul.f32 %v1103, 0.03125
      %v1157 = vmul.f32 %v1106, 0.03125
      %v1158 = vmul.f32 %v1109, 0.03125
      %v1159 = vmul.f32 %v1112, 0.03125
      %v1160 = vmul.f32 %v1115, 0.03125
      %v1161 = vmul.f32 %v1118, 0.03125
      %v1162 = vmul.f32 %v1121, 0.03125
      %v1163 = vmul.f32 %v1124, 0.03125
      %v1164 = vmul.f32 %v1127, 0.03125
      %v1165 = vmul.f32 %v1130, 0.03125
      %v1166 = vmul.f32 %v1133, 0.03125
      %v1167 = vmul.f32 %v1136, 0.03125
      %v1168 = vmul.f32 %v1139, 0.03125
      %v1169 = vmul.f32 %v1142, 0.03125
      %v1170 = vmul.f32 %v1145, 0.03125
      %v1171 = vmul.f32 %v1148, 0.03125
      %v1172 = vmul.f32 %v1151, 0.03125
      %v1173 = vmul.f32 %v1154, 0.03125
      %v1174 = vadd.f32 %v1155, 1e-05
      %v1175 = vadd.f32 %v1156, 1e-05
      %v1176 = vadd.f32 %v1157, 1e-05
      %v1177 = vadd.f32 %v1158, 1e-05
      %v1178 = vadd.f32 %v1159, 1e-05
      %v1179 = vadd.f32 %v1160, 1e-05
      %v1180 = vadd.f32 %v1161, 1e-05
      %v1181 = vadd.f32 %v1162, 1e-05
      %v1182 = vadd.f32 %v1163, 1e-05
      %v1183 = vadd.f32 %v1164, 1e-05
      %v1184 = vadd.f32 %v1165, 1e-05
      %v1185 = vadd.f32 %v1166, 1e-05
      %v1186 = vadd.f32 %v1167, 1e-05
      %v1187 = vadd.f32 %v1168, 1e-05
      %v1188 = vadd.f32 %v1169, 1e-05
      %v1189 = vadd.f32 %v1170, 1e-05
      %v1190 = vadd.f32 %v1171, 1e-05
      %v1191 = vadd.f32 %v1172, 1e-05
      %v1192 = vadd.f32 %v1173, 1e-05
      %v1193 = vrsqrt.pop %v1174
      %v1194 = vrsqrt.pop %v1175
      %v1195 = vrsqrt.pop %v1176
      %v1196 = vrsqrt.pop %v1177
      %v1197 = vrsqrt.pop %v1178
      %v1198 = vrsqrt.pop %v1179
      %v1199 = vrsqrt.pop %v1180
      %v1200 = vrsqrt.pop %v1181
      %v1201 = vrsqrt.pop %v1182
      %v1202 = vrsqrt.pop %v1183
      %v1203 = vrsqrt.pop %v1184
      %v1204 = vrsqrt.pop %v1185
      %v1205 = vrsqrt.pop %v1186
      %v1206 = vrsqrt.pop %v1187
      %v1207 = vrsqrt.pop %v1188
      %v1208 = vrsqrt.pop %v1189
      %v1209 = vrsqrt.pop %v1190
      %v1210 = vrsqrt.pop %v1191
      %v1211 = vrsqrt.pop %v1192
      %v1212 = vmul.f32 %v1060, %v1193
      %v1213 = vmul.f32 %v1061, %v1194
      %v1214 = vmul.f32 %v1062, %v1195
      %v1215 = vmul.f32 %v1063, %v1196
      %v1216 = vmul.f32 %v1064, %v1197
      %v1217 = vmul.f32 %v1065, %v1198
      %v1218 = vmul.f32 %v1066, %v1199
      %v1219 = vmul.f32 %v1067, %v1200
      %v1220 = vmul.f32 %v1068, %v1201
      %v1221 = vmul.f32 %v1069, %v1202
      %v1222 = vmul.f32 %v1070, %v1203
      %v1223 = vmul.f32 %v1071, %v1204
      %v1224 = vmul.f32 %v1072, %v1205
      %v1225 = vmul.f32 %v1073, %v1206
      %v1226 = vmul.f32 %v1074, %v1207
      %v1227 = vmul.f32 %v1075, %v1208
      %v1228 = vmul.f32 %v1076, %v1209
      %v1229 = vmul.f32 %v1077, %v1210
      %v1230 = vmul.f32 %v1078, %v1211
      %v1231 = vld [vmem:[%s5] sm:$0x1]
      %v1233 = vlaneseq
      %v1234 = vshrl.u32 %v1233, 7
      %v1235 = vsub.s32 0, %v1234
      %v1236 = vrot.slane %v1231, %v1235
      %v1238 = vmul.f32 %v1212, %v1236
      %v1239 = vmul.f32 %v1213, %v1236
      %v1240 = vmul.f32 %v1214, %v1236
      %v1241 = vmul.f32 %v1215, %v1236
      %v1242 = vmul.f32 %v1216, %v1236
      %v1243 = vmul.f32 %v1217, %v1236
      %v1244 = vmul.f32 %v1218, %v1236
      %v1245 = vmul.f32 %v1219, %v1236
      %v1246 = vmul.f32 %v1220, %v1236
      %v1247 = vmul.f32 %v1221, %v1236
      %v1248 = vmul.f32 %v1222, %v1236
      %v1249 = vmul.f32 %v1223, %v1236
      %v1250 = vmul.f32 %v1224, %v1236
      %v1251 = vmul.f32 %v1225, %v1236
      %v1252 = vmul.f32 %v1226, %v1236
      %v1253 = vmul.f32 %v1227, %v1236
      %v1254 = vmul.f32 %v1228, %v1236
      %v1255 = vmul.f32 %v1229, %v1236
      %v1256 = vmul.f32 %v1230, %v1236
      %v1257 = vld [vmem:[%s6] sm:$0x1]
      %v1259 = vlaneseq
      %v1260 = vshrl.u32 %v1259, 7
      %v1261 = vsub.s32 0, %v1260
      %v1262 = vrot.slane %v1257, %v1261
      %v1264 = vadd.f32 %v1238, %v1262
      %v1265 = vadd.f32 %v1239, %v1262
      %v1266 = vadd.f32 %v1240, %v1262
      %v1267 = vadd.f32 %v1241, %v1262
      %v1268 = vadd.f32 %v1242, %v1262
      %v1269 = vadd.f32 %v1243, %v1262
      %v1270 = vadd.f32 %v1244, %v1262
      %v1271 = vadd.f32 %v1245, %v1262
      %v1272 = vadd.f32 %v1246, %v1262
      %v1273 = vadd.f32 %v1247, %v1262
      %v1274 = vadd.f32 %v1248, %v1262
      %v1275 = vadd.f32 %v1249, %v1262
      %v1276 = vadd.f32 %v1250, %v1262
      %v1277 = vadd.f32 %v1251, %v1262
      %v1278 = vadd.f32 %v1252, %v1262
      %v1279 = vadd.f32 %v1253, %v1262
      %v1280 = vadd.f32 %v1254, %v1262
      %v1281 = vadd.f32 %v1255, %v1262
      %v1282 = vadd.f32 %v1256, %v1262
      %v1283 = vmul.f32 %v1264, 0.2
      %v1284 = vmul.f32 %v1265, 0.2
      %v1285 = vmul.f32 %v1266, 0.2
      %v1286 = vmul.f32 %v1267, 0.2
      %v1287 = vmul.f32 %v1268, 0.2
      %v1288 = vmul.f32 %v1269, 0.2
      %v1289 = vmul.f32 %v1270, 0.2
      %v1290 = vmul.f32 %v1271, 0.2
      %v1291 = vmul.f32 %v1272, 0.2
      %v1292 = vmul.f32 %v1273, 0.2
      %v1293 = vmul.f32 %v1274, 0.2
      %v1294 = vmul.f32 %v1275, 0.2
      %v1295 = vmul.f32 %v1276, 0.2
      %v1296 = vmul.f32 %v1277, 0.2
      %v1297 = vmul.f32 %v1278, 0.2
      %v1298 = vmul.f32 %v1279, 0.2
      %v1299 = vmul.f32 %v1280, 0.2
      %v1300 = vmul.f32 %v1281, 0.2
      %v1301 = vmul.f32 %v1282, 0.2
      %v1302 = vmul.f32 %v282, 0.8
      %v1303 = vmul.f32 %v283, 0.8
      %v1304 = vmul.f32 %v284, 0.8
      %v1305 = vmul.f32 %v285, 0.8
      %v1306 = vmul.f32 %v286, 0.8
      %v1307 = vmul.f32 %v287, 0.8
      %v1308 = vmul.f32 %v288, 0.8
      %v1309 = vmul.f32 %v289, 0.8
      %v1310 = vmul.f32 %v290, 0.8
      %v1311 = vmul.f32 %v291, 0.8
      %v1312 = vmul.f32 %v292, 0.8
      %v1313 = vmul.f32 %v293, 0.8
      %v1314 = vmul.f32 %v294, 0.8
      %v1315 = vmul.f32 %v295, 0.8
      %v1316 = vmul.f32 %v296, 0.8
      %v1317 = vmul.f32 %v297, 0.8
      %v1318 = vmul.f32 %v298, 0.8
      %v1319 = vmul.f32 %v299, 0.8
      %v1320 = vmul.f32 %v300, 0.8
      %v1321 = vadd.f32 %v1283, %v1302
      %v1322 = vadd.f32 %v1284, %v1303
      %v1323 = vadd.f32 %v1285, %v1304
      %v1324 = vadd.f32 %v1286, %v1305
      %v1325 = vadd.f32 %v1287, %v1306
      %v1326 = vadd.f32 %v1288, %v1307
      %v1327 = vadd.f32 %v1289, %v1308
      %v1328 = vadd.f32 %v1290, %v1309
      %v1329 = vadd.f32 %v1291, %v1310
      %v1330 = vadd.f32 %v1292, %v1311
      %v1331 = vadd.f32 %v1293, %v1312
      %v1332 = vadd.f32 %v1294, %v1313
      %v1333 = vadd.f32 %v1295, %v1314
      %v1334 = vadd.f32 %v1296, %v1315
      %v1335 = vadd.f32 %v1297, %v1316
      %v1336 = vadd.f32 %v1298, %v1317
      %v1337 = vadd.f32 %v1299, %v1318
      %v1338 = vadd.f32 %v1300, %v1319
      %v1339 = vadd.f32 %v1301, %v1320
      %1340 = vst.msk [vmem:[%s280] sm:$0xff] %vm305, %v1321
      %1341 = vst.msk [vmem:[%s280 + $0x8] sm:$0xff] %vm305, %v1322
      %1342 = vst.msk [vmem:[%s280 + $0x10] sm:$0xff] %vm305, %v1323
      %1343 = vst.msk [vmem:[%s280 + $0x18] sm:$0xff] %vm305, %v1324
      %1344 = vst.msk [vmem:[%s280 + $0x20] sm:$0xff] %vm305, %v1325
      %1345 = vst.msk [vmem:[%s280 + $0x28] sm:$0xff] %vm305, %v1326
      %1346 = vst.msk [vmem:[%s280 + $0x30] sm:$0xff] %vm305, %v1327
      %1347 = vst.msk [vmem:[%s280 + $0x38] sm:$0xff] %vm305, %v1328
      %1348 = vst.msk [vmem:[%s280 + $0x40] sm:$0xff] %vm305, %v1329
      %1349 = vst.msk [vmem:[%s280 + $0x48] sm:$0xff] %vm305, %v1330
      %1350 = vst.msk [vmem:[%s280 + $0x50] sm:$0xff] %vm305, %v1331
      %1351 = vst.msk [vmem:[%s280 + $0x58] sm:$0xff] %vm305, %v1332
      %1352 = vst.msk [vmem:[%s280 + $0x60] sm:$0xff] %vm305, %v1333
      %1353 = vst.msk [vmem:[%s280 + $0x68] sm:$0xff] %vm305, %v1334
      %1354 = vst.msk [vmem:[%s280 + $0x70] sm:$0xff] %vm305, %v1335
      %1355 = vst.msk [vmem:[%s280 + $0x78] sm:$0xff] %vm305, %v1336
      %1356 = vst.msk [vmem:[%s280 + $0x80] sm:$0xff] %vm305, %v1337
      %1357 = vst.msk [vmem:[%s280 + $0x88] sm:$0xff] %vm305, %v1338
      %1358 = vst.msk [vmem:[%s280 + $0x90] sm:$0xff] %vm305, %v1339
      %s1359 = smul.u32 19, %s18
      %p1360 = scmp.lt.s32.totalorder %s1359, 37
      %s1361 = scalar_select %p1360, %s1359, 37
      %s1362 = smul.addr %s1361, 8
      %s1363 = scalar_lea.vmem %s7, %s1362
      // Predicated region
      $region49: #{tpu_custom_call.1} parent=47 // pred_check
        %p1364 = pneg %p188
      $region50: #{tpu_custom_call.1} parent=47 // pred_check_branch
        %1366 = sbr.rel (%p1364) target = $region52
      $region51: #{tpu_custom_call.1} parent=47 // pred_region
        %s1367 = smul.u32 19, %s18
      $region52: #{tpu_custom_call.1} parent=47 // pred_fallthru
        _
    $region48: #{tpu_custom_call.1} parent=5 // pred_fallthru
      _
    %p1368 = scmp.le.s32.totalorder 2, %s13
    // Predicated region
    $region53: #{tpu_custom_call.1} parent=5 // pred_check
      %p1369 = pneg %p1368
    $region54: #{tpu_custom_call.1} parent=5 // pred_check_branch
      %1371 = sbr.rel (%p1369) target = $region56
    $region55: #{tpu_custom_call.1} parent=5 // pred_region
      %s1372 = ssub.s32 %s13, 2
      // Predicated region
      $region57: #{tpu_custom_call.1} parent=55 // pred_check
        %p1373 = pneg %p194
      $region58: #{tpu_custom_call.1} parent=55 // pred_check_branch
        %1375 = sbr.rel (%p1373) target = $region60
      $region59: #{tpu_custom_call.1} parent=55 // pred_region
        %s1376 = smul.u32 19, %s19
        %p1377 = scmp.lt.s32.totalorder %s1376, 37
        %s1378 = scalar_select %p1377, %s1376, 37
        %s1379 = smul.addr %s1378, 8
        %s1380 = scalar_lea.vmem %s7, %s1379
      $region60: #{tpu_custom_call.1} parent=55 // pred_fallthru
        _
    $region56: #{tpu_custom_call.1} parent=5 // pred_fallthru
      _
  $region6: #{tpu_custom_call.1} parent=0 // loop_footer
    %s17 = sadd.s32 1, %s13
  $region7: #{tpu_custom_call.1} parent=0 // loop_footer_branch
    %12 = sbr.rel target = $region3
  $region8: #{tpu_custom_call.1} parent=0 // loop_exit
    _

// kernel: tpu_custom_call.1
$region0: #{tpu_custom_call.1}
  #allocation0 [shape = 'u32[]', space=smem, size = 0x4, offset = 0x4, fixed_abs, tag = 'smem constant byte address 0x4 - core index']
  #allocation1 [shape = 'u32[144,128]{1,0:T(1,128)}', space=vmem, size = 0x12000, scoped, tag = 'internal scratch']
  %s0 = inlined_call_operand.vmem [shape: f32[300,32], index: 0, kind: input, shape index: {}]
  %s1 = inlined_call_operand.vmem [shape: f32[32,128], index: 1, kind: input, shape index: {}]
  %s2 = inlined_call_operand.vmem [shape: f32[1,128], index: 2, kind: input, shape index: {}]
  %s3 = inlined_call_operand.vmem [shape: f32[1,128], index: 3, kind: input, shape index: {}]
  %s4 = inlined_call_operand.vmem [shape: f32[128,32], index: 4, kind: input, shape index: {}]
  %s5 = inlined_call_operand.vmem [shape: f32[1,32], index: 5, kind: input, shape index: {}]
  %s6 = inlined_call_operand.vmem [shape: f32[1,32], index: 6, kind: input, shape index: {}]
  %s7 = inlined_call_operand.vmem [shape: f32[300,32], index: 7, kind: output, shape index: {}]
  %s8 = sld [smem:[#allocation0]]
  $region61: #{tpu_custom_call.1} parent=0
    _
  %s10 = ssub.s32 1, %s8
  %s11 = scalar_select 0, %s10, %s8
  loop: start=0, step=1, limit=4
  $region2: #{tpu_custom_call.1} parent=0 // loop_pre_header
    _
  $region3: #{tpu_custom_call.1} parent=0 // loop_header
    %s13 = sphi 0, %s17
    %p14 = scmp.ge.s32.totalorder %s13, 4
    %s23 = sphi 0, %s25
    %s26 = sphi 0, %s23
    %s27 = sphi 0, %s26
    %s43 = sphi 0, %s27
    %s47 = sphi 0, %s47
    %s49 = sphi 0, %s47
    %s50 = sphi 0, %s49
    %s64 = sphi 0, %s50
    %s68 = sphi 0, %s68
    %s70 = sphi 0, %s68
    %s71 = sphi 0, %s70
    %s85 = sphi 0, %s71
    %s89 = sphi 0, %s89
    %s91 = sphi 0, %s89
    %s92 = sphi 0, %s91
    %s106 = sphi 0, %s92
    %s110 = sphi 0, %s110
    %s112 = sphi 0, %s110
    %s113 = sphi 0, %s112
    %s127 = sphi 0, %s113
    %s131 = sphi 0, %s131
    %s133 = sphi 0, %s131
    %s134 = sphi 0, %s133
    %s148 = sphi 0, %s134
    %s152 = sphi 0, %s152
    %s154 = sphi 0, %s152
    %s155 = sphi 0, %s154
    %s169 = sphi 0, %s155
    %s175 = sphi 0, %s177
    %s178 = sphi 0, %s175
    %s179 = sphi 0, %s178
    %s195 = sphi 0, %s179
  $region4: #{tpu_custom_call.1} parent=0 // loop_header_branch
    %16 = sbr.rel (%p14) target = $region8
  $region5: #{tpu_custom_call.1} parent=0 // loop_body
    %s18 = ssub.s32 %s13, 1
    %s19 = ssub.s32 %s13, 2
    %s20 = sadd.s32 %s13, 1
    %s21 = ssub.s32 %s13, %s20
    %p22 = scmp.eq.s32.totalorder %s21, 0
    %s24 = sadd.s32 %s23, 1
    %s25 = scalar_select %p22, %s23, %s24
    %p28 = pneg %p22
    %p29 = scmp.eq.s32.totalorder %s13, 1
    %p30 = por %p28, %p29
    %p31 = scmp.ne.s32.totalorder %s23, %s26
    %p32 = scmp.eq.s32.totalorder %s13, 0
    %p33 = por %p31, %p32
    %p34 = scmp.ne.s32.totalorder %s23, %s26
    %p35 = scmp.eq.s32.totalorder %s18, 1
    %p36 = por %p34, %p35
    %p37 = scmp.ne.s32.totalorder %s26, %s27
    %p38 = scmp.eq.s32.totalorder %s18, 0
    %p39 = por %p37, %p38
    %p40 = scmp.ne.s32.totalorder %s26, %s27
    %p41 = scmp.eq.s32.totalorder %s19, 1
    %p42 = por %p40, %p41
    %p44 = scmp.ne.s32.totalorder %s27, %s43
    %p45 = scmp.eq.s32.totalorder %s19, 0
    %p46 = por %p44, %p45
    %s48 = sadd.s32 %s47, 1
    %p51 = scmp.eq.s32.totalorder %s13, 1
    %p52 = scmp.ne.s32.totalorder %s47, %s49
    %p53 = scmp.eq.s32.totalorder %s13, 0
    %p54 = por %p52, %p53
    %p55 = scmp.ne.s32.totalorder %s47, %s49
    %p56 = scmp.eq.s32.totalorder %s18, 1
    %p57 = por %p55, %p56
    %p58 = scmp.ne.s32.totalorder %s49, %s50
    %p59 = scmp.eq.s32.totalorder %s18, 0
    %p60 = por %p58, %p59
    %p61 = scmp.ne.s32.totalorder %s49, %s50
    %p62 = scmp.eq.s32.totalorder %s19, 1
    %p63 = por %p61, %p62
    %p65 = scmp.ne.s32.totalorder %s50, %s64
    %p66 = scmp.eq.s32.totalorder %s19, 0
    %p67 = por %p65, %p66
    %s69 = sadd.s32 %s68, 1
    %p72 = scmp.eq.s32.totalorder %s13, 1
    %p73 = scmp.ne.s32.totalorder %s68, %s70
    %p74 = scmp.eq.s32.totalorder %s13, 0
    %p75 = por %p73, %p74
    %p76 = scmp.ne.s32.totalorder %s68, %s70
    %p77 = scmp.eq.s32.totalorder %s18, 1
    %p78 = por %p76, %p77
    %p79 = scmp.ne.s32.totalorder %s70, %s71
    %p80 = scmp.eq.s32.totalorder %s18, 0
    %p81 = por %p79, %p80
    %p82 = scmp.ne.s32.totalorder %s70, %s71
    %p83 = scmp.eq.s32.totalorder %s19, 1
    %p84 = por %p82, %p83
    %p86 = scmp.ne.s32.totalorder %s71, %s85
    %p87 = scmp.eq.s32.totalorder %s19, 0
    %p88 = por %p86, %p87
    %s90 = sadd.s32 %s89, 1
    %p93 = scmp.eq.s32.totalorder %s13, 1
    %p94 = scmp.ne.s32.totalorder %s89, %s91
    %p95 = scmp.eq.s32.totalorder %s13, 0
    %p96 = por %p94, %p95
    %p97 = scmp.ne.s32.totalorder %s89, %s91
    %p98 = scmp.eq.s32.totalorder %s18, 1
    %p99 = por %p97, %p98
    %p100 = scmp.ne.s32.totalorder %s91, %s92
    %p101 = scmp.eq.s32.totalorder %s18, 0
    %p102 = por %p100, %p101
    %p103 = scmp.ne.s32.totalorder %s91, %s92
    %p104 = scmp.eq.s32.totalorder %s19, 1
    %p105 = por %p103, %p104
    %p107 = scmp.ne.s32.totalorder %s92, %s106
    %p108 = scmp.eq.s32.totalorder %s19, 0
    %p109 = por %p107, %p108
    %s111 = sadd.s32 %s110, 1
    %p114 = scmp.eq.s32.totalorder %s13, 1
    %p115 = scmp.ne.s32.totalorder %s110, %s112
    %p116 = scmp.eq.s32.totalorder %s13, 0
    %p117 = por %p115, %p116
    %p118 = scmp.ne.s32.totalorder %s110, %s112
    %p119 = scmp.eq.s32.totalorder %s18, 1
    %p120 = por %p118, %p119
    %p121 = scmp.ne.s32.totalorder %s112, %s113
    %p122 = scmp.eq.s32.totalorder %s18, 0
    %p123 = por %p121, %p122
    %p124 = scmp.ne.s32.totalorder %s112, %s113
    %p125 = scmp.eq.s32.totalorder %s19, 1
    %p126 = por %p124, %p125
    %p128 = scmp.ne.s32.totalorder %s113, %s127
    %p129 = scmp.eq.s32.totalorder %s19, 0
    %p130 = por %p128, %p129
    %s132 = sadd.s32 %s131, 1
    %p135 = scmp.eq.s32.totalorder %s13, 1
    %p136 = scmp.ne.s32.totalorder %s131, %s133
    %p137 = scmp.eq.s32.totalorder %s13, 0
    %p138 = por %p136, %p137
    %p139 = scmp.ne.s32.totalorder %s131, %s133
    %p140 = scmp.eq.s32.totalorder %s18, 1
    %p141 = por %p139, %p140
    %p142 = scmp.ne.s32.totalorder %s133, %s134
    %p143 = scmp.eq.s32.totalorder %s18, 0
    %p144 = por %p142, %p143
    %p145 = scmp.ne.s32.totalorder %s133, %s134
    %p146 = scmp.eq.s32.totalorder %s19, 1
    %p147 = por %p145, %p146
    %p149 = scmp.ne.s32.totalorder %s134, %s148
    %p150 = scmp.eq.s32.totalorder %s19, 0
    %p151 = por %p149, %p150
    %s153 = sadd.s32 %s152, 1
    %p156 = scmp.eq.s32.totalorder %s13, 1
    %p157 = scmp.ne.s32.totalorder %s152, %s154
    %p158 = scmp.eq.s32.totalorder %s13, 0
    %p159 = por %p157, %p158
    %p160 = scmp.ne.s32.totalorder %s152, %s154
    %p161 = scmp.eq.s32.totalorder %s18, 1
    %p162 = por %p160, %p161
    %p163 = scmp.ne.s32.totalorder %s154, %s155
    %p164 = scmp.eq.s32.totalorder %s18, 0
    %p165 = por %p163, %p164
    %p166 = scmp.ne.s32.totalorder %s154, %s155
    %p167 = scmp.eq.s32.totalorder %s19, 1
    %p168 = por %p166, %p167
    %p170 = scmp.ne.s32.totalorder %s155, %s169
    %p171 = scmp.eq.s32.totalorder %s19, 0
    %p172 = por %p170, %p171
    %s173 = ssub.s32 %s13, %s20
    %p174 = scmp.eq.s32.totalorder %s173, 0
    %s176 = sadd.s32 %s175, 1
    %s177 = scalar_select %p174, %s175, %s176
    %p180 = pneg %p174
    %p181 = scmp.eq.s32.totalorder %s13, 1
    %p182 = por %p180, %p181
    %p183 = scmp.ne.s32.totalorder %s175, %s178
    %p184 = scmp.eq.s32.totalorder %s13, 0
    %p185 = por %p183, %p184
    %p186 = scmp.ne.s32.totalorder %s175, %s178
    %p187 = scmp.eq.s32.totalorder %s18, 1
    %p188 = por %p186, %p187
    %p189 = scmp.ne.s32.totalorder %s178, %s179
    %p190 = scmp.eq.s32.totalorder %s18, 0
    %p191 = por %p189, %p190
    %p192 = scmp.ne.s32.totalorder %s178, %s179
    %p193 = scmp.eq.s32.totalorder %s19, 1
    %p194 = por %p192, %p193
    %p196 = scmp.ne.s32.totalorder %s179, %s195
    %p197 = scmp.eq.s32.totalorder %s19, 0
    %p198 = por %p196, %p197
    %p199 = scmp.le.s32.totalorder 1, %s13
    %p200 = scmp.lt.s32.totalorder %s13, 3
    %p201 = pnand %p199, %p200
    %p202 = pneg %p201
    // Predicated region
    $region9: #{tpu_custom_call.1} parent=5 // pred_check
      _
    $region10: #{tpu_custom_call.1} parent=5 // pred_check_branch
      %204 = sbr.rel (%p201) target = $region12
    $region11: #{tpu_custom_call.1} parent=5 // pred_region
      %s205 = ssub.s32 %s13, 1
      // Predicated region
      $region13: #{tpu_custom_call.1} parent=11 // pred_check
        %p206 = pneg %p60
      $region14: #{tpu_custom_call.1} parent=11 // pred_check_branch
        %208 = sbr.rel (%p206) target = $region16
      $region15: #{tpu_custom_call.1} parent=11 // pred_region
        _
      $region16: #{tpu_custom_call.1} parent=11 // pred_fallthru
        _
      // Predicated region
      $region17: #{tpu_custom_call.1} parent=11 // pred_check
        %p209 = pneg %p81
      $region18: #{tpu_custom_call.1} parent=11 // pred_check_branch
        %211 = sbr.rel (%p209) target = $region20
      $region19: #{tpu_custom_call.1} parent=11 // pred_region
        _
      $region20: #{tpu_custom_call.1} parent=11 // pred_fallthru
        _
      // Predicated region
      $region21: #{tpu_custom_call.1} parent=11 // pred_check
        %p212 = pneg %p102
      $region22: #{tpu_custom_call.1} parent=11 // pred_check_branch
        %214 = sbr.rel (%p212) target = $region24
      $region23: #{tpu_custom_call.1} parent=11 // pred_region
        _
      $region24: #{tpu_custom_call.1} parent=11 // pred_fallthru
        _
      // Predicated region
      $region25: #{tpu_custom_call.1} parent=11 // pred_check
        %p215 = pneg %p123
      $region26: #{tpu_custom_call.1} parent=11 // pred_check_branch
        %217 = sbr.rel (%p215) target = $region28
      $region27: #{tpu_custom_call.1} parent=11 // pred_region
        _
      $region28: #{tpu_custom_call.1} parent=11 // pred_fallthru
        _
      // Predicated region
      $region29: #{tpu_custom_call.1} parent=11 // pred_check
        %p218 = pneg %p144
      $region30: #{tpu_custom_call.1} parent=11 // pred_check_branch
        %220 = sbr.rel (%p218) target = $region32
      $region31: #{tpu_custom_call.1} parent=11 // pred_region
        _
      $region32: #{tpu_custom_call.1} parent=11 // pred_fallthru
        _
      // Predicated region
      $region33: #{tpu_custom_call.1} parent=11 // pred_check
        %p221 = pneg %p165
      $region34: #{tpu_custom_call.1} parent=11 // pred_check_branch
        %223 = sbr.rel (%p221) target = $region36
      $region35: #{tpu_custom_call.1} parent=11 // pred_region
        _
      $region36: #{tpu_custom_call.1} parent=11 // pred_fallthru
        _
    $region12: #{tpu_custom_call.1} parent=5 // pred_fallthru
      _
    %p224 = scmp.lt.s32.totalorder %s13, 2
    // Predicated region
    $region37: #{tpu_custom_call.1} parent=5 // pred_check
      %p225 = pneg %p224
    $region38: #{tpu_custom_call.1} parent=5 // pred_check_branch
      %227 = sbr.rel (%p225) target = $region40
    $region39: #{tpu_custom_call.1} parent=5 // pred_region
      // Predicated region
      $region41: #{tpu_custom_call.1} parent=39 // pred_check
        %p228 = pneg %p33
      $region42: #{tpu_custom_call.1} parent=39 // pred_check_branch
        %230 = sbr.rel (%p228) target = $region44
      $region43: #{tpu_custom_call.1} parent=39 // pred_region
        %s231 = smul.u32 19, %s13
        %p232 = scmp.lt.s32.totalorder %s231, 37
        %s233 = scalar_select %p232, %s231, 37
        %s234 = smul.addr %s233, 8
        %s235 = scalar_lea.vmem %s0, %s234
        %s236 = smul.u32 19, %s13
      $region44: #{tpu_custom_call.1} parent=39 // pred_fallthru
        _
    $region40: #{tpu_custom_call.1} parent=5 // pred_fallthru
      _
    %p237 = scmp.le.s32.totalorder 1, %s13
    %p238 = scmp.lt.s32.totalorder %s13, 3
    %p239 = pnand %p237, %p238
    %p240 = pneg %p239
    // Predicated region
    $region45: #{tpu_custom_call.1} parent=5 // pred_check
      _
    $region46: #{tpu_custom_call.1} parent=5 // pred_check_branch
      %242 = sbr.rel (%p239) target = $region48
    $region47: #{tpu_custom_call.1} parent=5 // pred_region
      %s243 = ssub.s32 %s13, 1
      %s244 = smul.u32 19, %s18
      %p245 = scmp.lt.s32.totalorder %s244, 37
      %s246 = scalar_select %p245, %s244, 37
      %s247 = smul.addr %s246, 8
      %s248 = scalar_lea.vmem %s0, %s247
      %p249 = pneg %p39
      %p250 = pneg %p36
      %p251 = pneg %p60
      %p252 = pneg %p57
      %p253 = pneg %p81
      %p254 = pneg %p78
      %p255 = pneg %p102
      %p256 = pneg %p99
      %p257 = pneg %p123
      %p258 = pneg %p120
      %p259 = pneg %p144
      %p260 = pneg %p141
      %p261 = pneg %p165
      %p262 = pneg %p162
      %p263 = pneg %p191
      %p264 = pneg %p188
      %s265 = smul.u32 19, %s18
      %p266 = scmp.lt.s32.totalorder %s265, 37
      %s267 = scalar_select %p266, %s265, 37
      %s268 = smul.addr %s267, 8
      %s269 = scalar_lea.vmem %s7, %s268
      %s270 = smul.u32 19, %s18
      %p271 = scmp.lt.s32.totalorder %s270, 37
      %s272 = scalar_select %p271, %s270, 37
      %s273 = smul.addr %s272, 8
      %s274 = scalar_lea.vmem %s0, %s273
      %s275 = smul.u32 19, %s18
      %s276 = smul.u32 19, %s18
      %p277 = scmp.lt.s32.totalorder %s276, 37
      %s278 = scalar_select %p277, %s276, 37
      %s279 = smul.addr %s278, 8
      %s280 = scalar_lea.vmem %s7, %s279
      %s281 = smul.u32 19, %s18
      %v282 = vld [vmem:[%s274] sm:$0xff]
      %v283 = vld [vmem:[%s274 + $0x8] sm:$0xff]
      %v284 = vld [vmem:[%s274 + $0x10] sm:$0xff]
      %v285 = vld [vmem:[%s274 + $0x18] sm:$0xff]
      %v286 = vld [vmem:[%s274 + $0x20] sm:$0xff]
      %v287 = vld [vmem:[%s274 + $0x28] sm:$0xff]
      %v288 = vld [vmem:[%s274 + $0x30] sm:$0xff]
      %v289 = vld [vmem:[%s274 + $0x38] sm:$0xff]
      %v290 = vld [vmem:[%s274 + $0x40] sm:$0xff]
      %v291 = vld [vmem:[%s274 + $0x48] sm:$0xff]
      %v292 = vld [vmem:[%s274 + $0x50] sm:$0xff]
      %v293 = vld [vmem:[%s274 + $0x58] sm:$0xff]
      %v294 = vld [vmem:[%s274 + $0x60] sm:$0xff]
      %v295 = vld [vmem:[%s274 + $0x68] sm:$0xff]
      %v296 = vld [vmem:[%s274 + $0x70] sm:$0xff]
      %v297 = vld [vmem:[%s274 + $0x78] sm:$0xff]
      %v298 = vld [vmem:[%s274 + $0x80] sm:$0xff]
      %v299 = vld [vmem:[%s274 + $0x88] sm:$0xff]
      %v300 = vld [vmem:[%s274 + $0x90] sm:$0xff]
      %v301 = vld [vmem:[%s1] sm:$0xff]
      %v302 = vld [vmem:[%s1 + $0x8] sm:$0xff]
      %v303 = vld [vmem:[%s1 + $0x10] sm:$0xff]
      %v304 = vld [vmem:[%s1 + $0x18] sm:$0xff]
      %vm305 = vcmask 261120
      %v307 = vsel %vm305, %v282, 0
      %v310 = vsel %vm305, %v283, 0
      %v313 = vsel %vm305, %v284, 0
      %v316 = vsel %vm305, %v285, 0
      %v319 = vsel %vm305, %v286, 0
      %v322 = vsel %vm305, %v287, 0
      %v325 = vsel %vm305, %v288, 0
      %v328 = vsel %vm305, %v289, 0
      %v331 = vsel %vm305, %v290, 0
      %v334 = vsel %vm305, %v291, 0
      %v337 = vsel %vm305, %v292, 0
      %v340 = vsel %vm305, %v293, 0
      %v343 = vsel %vm305, %v294, 0
      %v346 = vsel %vm305, %v295, 0
      %v349 = vsel %vm305, %v296, 0
      %v352 = vsel %vm305, %v297, 0
      %v355 = vsel %vm305, %v298, 0
      %v358 = vsel %vm305, %v299, 0
      %v361 = vsel %vm305, %v300, 0
      %363 = vmatprep.subr.mxu0 0.0
      %364 = vmatpush1.msra.mxu0 %v301
      %365 = vmatprep.subr.mxu0 0.0
      %366 = vmatpush1.msra.mxu0 %v302
      %367 = vmatprep.subr.mxu0 0.0
      %368 = vmatpush1.msra.mxu0 %v303
      %369 = vmatprep.subr.mxu0 0.0
      %370 = vmatpush1.msra.mxu0 %v304
      %371 = vmatprep.subr.mxu0 0.0
      %372 = vmatpush1.msra.mxu0 0.0
      %373 = vmatprep.subr.mxu0 0.0
      %374 = vmatpush1.msra.mxu0 0.0
      %375 = vmatprep.subr.mxu0 0.0
      %376 = vmatpush1.msra.mxu0 0.0
      %377 = vmatprep.subr.mxu0 0.0
      %378 = vmatpush1.msra.mxu0 0.0
      %379 = vmatprep.subr.mxu0 0.0
      %380 = vmatpush1.msra.mxu0 0.0
      %381 = vmatprep.subr.mxu0 0.0
      %382 = vmatpush1.msra.mxu0 0.0
      %383 = vmatprep.subr.mxu0 0.0
      %384 = vmatpush1.msra.mxu0 0.0
      %385 = vmatprep.subr.mxu0 0.0
      %386 = vmatpush1.msra.mxu0 0.0
      %387 = vmatprep.subr.mxu0 0.0
      %388 = vmatpush1.msra.mxu0 0.0
      %389 = vmatprep.subr.mxu0 0.0
      %390 = vmatpush1.msra.mxu0 0.0
      %391 = vmatprep.subr.mxu0 0.0
      %392 = vmatpush1.msra.mxu0 0.0
      %393 = vmatprep.subr.mxu0 0.0
      %394 = vmatpush1.msra.mxu0 0.0
      %395 = vmatprep.subr.mxu0 0.0
      %396 = vmatpush1.msra.mxu0 0.0
      %397 = vmatprep.subr.mxu0 0.0
      %398 = vmatpush1.msra.mxu0 0.0
      %399 = vmatprep.subr.mxu0 0.0
      %400 = vmatpush1.msra.mxu0 0.0
      %401 = vmatprep.subr.mxu0 0.0
      %402 = vmatpush1.msra.mxu0 0.0
      %403 = vmatprep.subr.mxu0 0.0
      %404 = vmatpush1.msra.mxu0 0.0
      %405 = vmatprep.subr.mxu0 0.0
      %406 = vmatpush1.msra.mxu0 0.0
      %407 = vmatprep.subr.mxu0 0.0
      %408 = vmatpush1.msra.mxu0 0.0
      %409 = vmatprep.subr.mxu0 0.0
      %410 = vmatpush1.msra.mxu0 0.0
      %411 = vmatprep.subr.mxu0 0.0
      %412 = vmatpush1.msra.mxu0 0.0
      %413 = vmatprep.subr.mxu0 0.0
      %414 = vmatpush1.msra.mxu0 0.0
      %415 = vmatprep.subr.mxu0 0.0
      %416 = vmatpush1.msra.mxu0 0.0
      %417 = vmatprep.subr.mxu0 0.0
      %418 = vmatpush1.msra.mxu0 0.0
      %419 = vmatprep.subr.mxu0 0.0
      %420 = vmatpush1.msra.mxu0 0.0
      %421 = vmatprep.subr.mxu0 0.0
      %422 = vmatpush1.msra.mxu0 0.0
      %423 = vmatprep.subr.mxu0 0.0
      %424 = vmatpush1.msra.mxu0 0.0
      %425 = vmatprep.subr.mxu0 0.0
      %426 = vmatpush1.msra.mxu0 0.0
      %427 = vmatprep.mubr.f32.mxu0 0.0
      %428 = vmatmul.mubr.f32.gmra.mrb[0].mxu0 %v307
      %v429 = vpop.f32.mrb[0].mxu0
      %v430 = vadd.f32 0.0, %v429
      %v431 = vpop.f32.mrb[0].mxu0
      %432 = vmatprep.mubr.f32.mxu0 0.0
      %433 = vmatmul.mubr.f32.gmra.mrb[0].mxu0 %v310
      %v434 = vpop.f32.mrb[0].mxu0
      %v435 = vadd.f32 0.0, %v434
      %v436 = vpop.f32.mrb[0].mxu0
      %437 = vmatprep.mubr.f32.mxu0 0.0
      %438 = vmatmul.mubr.f32.gmra.mrb[0].mxu0 %v313
      %v439 = vpop.f32.mrb[0].mxu0
      %v440 = vadd.f32 0.0, %v439
      %v441 = vpop.f32.mrb[0].mxu0
      %442 = vmatprep.mubr.f32.mxu0 0.0
      %443 = vmatmul.mubr.f32.gmra.mrb[0].mxu0 %v316
      %v444 = vpop.f32.mrb[0].mxu0
      %v445 = vadd.f32 0.0, %v444
      %v446 = vpop.f32.mrb[0].mxu0
      %447 = vmatprep.mubr.f32.mxu0 0.0
      %448 = vmatmul.mubr.f32.gmra.mrb[0].mxu0 %v319
      %v449 = vpop.f32.mrb[0].mxu0
      %v450 = vadd.f32 0.0, %v449
      %v451 = vpop.f32.mrb[0].mxu0
      %452 = vmatprep.mubr.f32.mxu0 0.0
      %453 = vmatmul.mubr.f32.gmra.mrb[0].mxu0 %v322
      %v454 = vpop.f32.mrb[0].mxu0
      %v455 = vadd.f32 0.0, %v454
      %v456 = vpop.f32.mrb[0].mxu0
      %457 = vmatprep.mubr.f32.mxu0 0.0
      %458 = vmatmul.mubr.f32.gmra.mrb[0].mxu0 %v325
      %v459 = vpop.f32.mrb[0].mxu0
      %v460 = vadd.f32 0.0, %v459
      %v461 = vpop.f32.mrb[0].mxu0
      %462 = vmatprep.mubr.f32.mxu0 0.0
      %463 = vmatmul.mubr.f32.gmra.mrb[0].mxu0 %v328
      %v464 = vpop.f32.mrb[0].mxu0
      %v465 = vadd.f32 0.0, %v464
      %v466 = vpop.f32.mrb[0].mxu0
      %467 = vmatprep.mubr.f32.mxu0 0.0
      %468 = vmatmul.mubr.f32.gmra.mrb[0].mxu0 %v331
      %v469 = vpop.f32.mrb[0].mxu0
      %v470 = vadd.f32 0.0, %v469
      %v471 = vpop.f32.mrb[0].mxu0
      %472 = vmatprep.mubr.f32.mxu0 0.0
      %473 = vmatmul.mubr.f32.gmra.mrb[0].mxu0 %v334
      %v474 = vpop.f32.mrb[0].mxu0
      %v475 = vadd.f32 0.0, %v474
      %v476 = vpop.f32.mrb[0].mxu0
      %477 = vmatprep.mubr.f32.mxu0 0.0
      %478 = vmatmul.mubr.f32.gmra.mrb[0].mxu0 %v337
      %v479 = vpop.f32.mrb[0].mxu0
      %v480 = vadd.f32 0.0, %v479
      %v481 = vpop.f32.mrb[0].mxu0
      %482 = vmatprep.mubr.f32.mxu0 0.0
      %483 = vmatmul.mubr.f32.gmra.mrb[0].mxu0 %v340
      %v484 = vpop.f32.mrb[0].mxu0
      %v485 = vadd.f32 0.0, %v484
      %v486 = vpop.f32.mrb[0].mxu0
      %487 = vmatprep.mubr.f32.mxu0 0.0
      %488 = vmatmul.mubr.f32.gmra.mrb[0].mxu0 %v343
      %v489 = vpop.f32.mrb[0].mxu0
      %v490 = vadd.f32 0.0, %v489
      %v491 = vpop.f32.mrb[0].mxu0
      %492 = vmatprep.mubr.f32.mxu0 0.0
      %493 = vmatmul.mubr.f32.gmra.mrb[0].mxu0 %v346
      %v494 = vpop.f32.mrb[0].mxu0
      %v495 = vadd.f32 0.0, %v494
      %v496 = vpop.f32.mrb[0].mxu0
      %497 = vmatprep.mubr.f32.mxu0 0.0
      %498 = vmatmul.mubr.f32.gmra.mrb[0].mxu0 %v349
      %v499 = vpop.f32.mrb[0].mxu0
      %v500 = vadd.f32 0.0, %v499
      %v501 = vpop.f32.mrb[0].mxu0
      %502 = vmatprep.mubr.f32.mxu0 0.0
      %503 = vmatmul.mubr.f32.gmra.mrb[0].mxu0 %v352
      %v504 = vpop.f32.mrb[0].mxu0
      %v505 = vadd.f32 0.0, %v504
      %v506 = vpop.f32.mrb[0].mxu0
      %507 = vmatprep.mubr.f32.mxu0 0.0
      %508 = vmatmul.mubr.f32.gmra.mrb[0].mxu0 %v355
      %v509 = vpop.f32.mrb[0].mxu0
      %v510 = vadd.f32 0.0, %v509
      %v511 = vpop.f32.mrb[0].mxu0
      %512 = vmatprep.mubr.f32.mxu0 0.0
      %513 = vmatmul.mubr.f32.gmra.mrb[0].mxu0 %v358
      %v514 = vpop.f32.mrb[0].mxu0
      %v515 = vadd.f32 0.0, %v514
      %v516 = vpop.f32.mrb[0].mxu0
      %517 = vmatprep.mubr.f32.mxu0 0.0
      %518 = vmatmul.mubr.f32.gmra.mrb[0].mxu0 %v361
      %v519 = vpop.f32.mrb[0].mxu0
      %v520 = vadd.f32 0.0, %v519
      %v521 = vpop.f32.mrb[0].mxu0
      %522 = vdwg.mxu0
      %523 = vadd.xlane.f32.xlu0 %v430
      %v524 = vpop.xlane.xlu0 %523
      %525 = vadd.xlane.f32.xlu0 %v435
      %v526 = vpop.xlane.xlu0 %525
      %527 = vadd.xlane.f32.xlu0 %v440
      %v528 = vpop.xlane.xlu0 %527
      %529 = vadd.xlane.f32.xlu0 %v445
      %v530 = vpop.xlane.xlu0 %529
      %531 = vadd.xlane.f32.xlu0 %v450
      %v532 = vpop.xlane.xlu0 %531
      %533 = vadd.xlane.f32.xlu0 %v455
      %v534 = vpop.xlane.xlu0 %533
      %535 = vadd.xlane.f32.xlu0 %v460
      %v536 = vpop.xlane.xlu0 %535
      %537 = vadd.xlane.f32.xlu0 %v465
      %v538 = vpop.xlane.xlu0 %537
      %539 = vadd.xlane.f32.xlu0 %v470
      %v540 = vpop.xlane.xlu0 %539
      %541 = vadd.xlane.f32.xlu0 %v475
      %v542 = vpop.xlane.xlu0 %541
      %543 = vadd.xlane.f32.xlu0 %v480
      %v544 = vpop.xlane.xlu0 %543
      %545 = vadd.xlane.f32.xlu0 %v485
      %v546 = vpop.xlane.xlu0 %545
      %547 = vadd.xlane.f32.xlu0 %v490
      %v548 = vpop.xlane.xlu0 %547
      %549 = vadd.xlane.f32.xlu0 %v495
      %v550 = vpop.xlane.xlu0 %549
      %551 = vadd.xlane.f32.xlu0 %v500
      %v552 = vpop.xlane.xlu0 %551
      %553 = vadd.xlane.f32.xlu0 %v505
      %v554 = vpop.xlane.xlu0 %553
      %555 = vadd.xlane.f32.xlu0 %v510
      %v556 = vpop.xlane.xlu0 %555
      %557 = vadd.xlane.f32.xlu0 %v515
      %v558 = vpop.xlane.xlu0 %557
      %559 = vadd.xlane.f32.xlu0 %v520
      %v560 = vpop.xlane.xlu0 %559
      %v561 = vmul.f32 %v524, 0.125
      %v562 = vmul.f32 %v526, 0.125
      %v563 = vmul.f32 %v528, 0.125
      %v564 = vmul.f32 %v530, 0.125
      %v565 = vmul.f32 %v532, 0.125
      %v566 = vmul.f32 %v534, 0.125
      %v567 = vmul.f32 %v536, 0.125
      %v568 = vmul.f32 %v538, 0.125
      %v569 = vmul.f32 %v540, 0.125
      %v570 = vmul.f32 %v542, 0.125
      %v571 = vmul.f32 %v544, 0.125
      %v572 = vmul.f32 %v546, 0.125
      %v573 = vmul.f32 %v548, 0.125
      %v574 = vmul.f32 %v550, 0.125
      %v575 = vmul.f32 %v552, 0.125
      %v576 = vmul.f32 %v554, 0.125
      %v577 = vmul.f32 %v556, 0.125
      %v578 = vmul.f32 %v558, 0.125
      %v579 = vmul.f32 %v560, 0.125
      %v580 = vsub.f32 %v430, %v561
      %v581 = vsub.f32 %v435, %v562
      %v582 = vsub.f32 %v440, %v563
      %v583 = vsub.f32 %v445, %v564
      %v584 = vsub.f32 %v450, %v565
      %v585 = vsub.f32 %v455, %v566
      %v586 = vsub.f32 %v460, %v567
      %v587 = vsub.f32 %v465, %v568
      %v588 = vsub.f32 %v470, %v569
      %v589 = vsub.f32 %v475, %v570
      %v590 = vsub.f32 %v480, %v571
      %v591 = vsub.f32 %v485, %v572
      %v592 = vsub.f32 %v490, %v573
      %v593 = vsub.f32 %v495, %v574
      %v594 = vsub.f32 %v500, %v575
      %v595 = vsub.f32 %v505, %v576
      %v596 = vsub.f32 %v510, %v577
      %v597 = vsub.f32 %v515, %v578
      %v598 = vsub.f32 %v520, %v579
      %v599 = vlaneseq
      %v600 = vand.u32 %v599, 127
      %vm601 = vcmp.lt.s32.totalorder %v600, 8
      %v602 = vsel %vm601, 1, 0
      %vm603 = vcmp.eq.s32.totalorder %v602, 1
      %v604 = vsel %vm603, %v580, 0.0
      %v605 = vsel %vm603, %v581, 0.0
      %v606 = vsel %vm603, %v582, 0.0
      %v607 = vsel %vm603, %v583, 0.0
      %v608 = vsel %vm603, %v584, 0.0
      %v609 = vsel %vm603, %v585, 0.0
      %v610 = vsel %vm603, %v586, 0.0
      %v611 = vsel %vm603, %v587, 0.0
      %v612 = vsel %vm603, %v588, 0.0
      %v613 = vsel %vm603, %v589, 0.0
      %v614 = vsel %vm603, %v590, 0.0
      %v615 = vsel %vm603, %v591, 0.0
      %v616 = vsel %vm603, %v592, 0.0
      %v617 = vsel %vm603, %v593, 0.0
      %v618 = vsel %vm603, %v594, 0.0
      %v619 = vsel %vm603, %v595, 0.0
      %v620 = vsel %vm603, %v596, 0.0
      %v621 = vsel %vm603, %v597, 0.0
      %v622 = vsel %vm603, %v598, 0.0
      %v623 = vmul.f32 %v604, %v604
      %v624 = vmul.f32 %v605, %v605
      %v625 = vmul.f32 %v606, %v606
      %v626 = vmul.f32 %v607, %v607
      %v627 = vmul.f32 %v608, %v608
      %v628 = vmul.f32 %v609, %v609
      %v629 = vmul.f32 %v610, %v610
      %v630 = vmul.f32 %v611, %v611
      %v631 = vmul.f32 %v612, %v612
      %v632 = vmul.f32 %v613, %v613
      %v633 = vmul.f32 %v614, %v614
      %v634 = vmul.f32 %v615, %v615
      %v635 = vmul.f32 %v616, %v616
      %v636 = vmul.f32 %v617, %v617
      %v637 = vmul.f32 %v618, %v618
      %v638 = vmul.f32 %v619, %v619
      %v639 = vmul.f32 %v620, %v620
      %v640 = vmul.f32 %v621, %v621
      %v641 = vmul.f32 %v622, %v622
      %642 = vadd.xlane.f32.xlu0 %v623
      %v643 = vpop.xlane.xlu0 %642
      %644 = vadd.xlane.f32.xlu0 %v624
      %v645 = vpop.xlane.xlu0 %644
      %646 = vadd.xlane.f32.xlu0 %v625
      %v647 = vpop.xlane.xlu0 %646
      %648 = vadd.xlane.f32.xlu0 %v626
      %v649 = vpop.xlane.xlu0 %648
      %650 = vadd.xlane.f32.xlu0 %v627
      %v651 = vpop.xlane.xlu0 %650
      %652 = vadd.xlane.f32.xlu0 %v628
      %v653 = vpop.xlane.xlu0 %652
      %654 = vadd.xlane.f32.xlu0 %v629
      %v655 = vpop.xlane.xlu0 %654
      %656 = vadd.xlane.f32.xlu0 %v630
      %v657 = vpop.xlane.xlu0 %656
      %658 = vadd.xlane.f32.xlu0 %v631
      %v659 = vpop.xlane.xlu0 %658
      %660 = vadd.xlane.f32.xlu0 %v632
      %v661 = vpop.xlane.xlu0 %660
      %662 = vadd.xlane.f32.xlu0 %v633
      %v663 = vpop.xlane.xlu0 %662
      %664 = vadd.xlane.f32.xlu0 %v634
      %v665 = vpop.xlane.xlu0 %664
      %666 = vadd.xlane.f32.xlu0 %v635
      %v667 = vpop.xlane.xlu0 %666
      %668 = vadd.xlane.f32.xlu0 %v636
      %v669 = vpop.xlane.xlu0 %668
      %670 = vadd.xlane.f32.xlu0 %v637
      %v671 = vpop.xlane.xlu0 %670
      %672 = vadd.xlane.f32.xlu0 %v638
      %v673 = vpop.xlane.xlu0 %672
      %674 = vadd.xlane.f32.xlu0 %v639
      %v675 = vpop.xlane.xlu0 %674
      %676 = vadd.xlane.f32.xlu0 %v640
      %v677 = vpop.xlane.xlu0 %676
      %678 = vadd.xlane.f32.xlu0 %v641
      %v679 = vpop.xlane.xlu0 %678
      %v680 = vmul.f32 %v643, 0.125
      %v681 = vmul.f32 %v645, 0.125
      %v682 = vmul.f32 %v647, 0.125
      %v683 = vmul.f32 %v649, 0.125
      %v684 = vmul.f32 %v651, 0.125
      %v685 = vmul.f32 %v653, 0.125
      %v686 = vmul.f32 %v655, 0.125
      %v687 = vmul.f32 %v657, 0.125
      %v688 = vmul.f32 %v659, 0.125
      %v689 = vmul.f32 %v661, 0.125
      %v690 = vmul.f32 %v663, 0.125
      %v691 = vmul.f32 %v665, 0.125
      %v692 = vmul.f32 %v667, 0.125
      %v693 = vmul.f32 %v669, 0.125
      %v694 = vmul.f32 %v671, 0.125
      %v695 = vmul.f32 %v673, 0.125
      %v696 = vmul.f32 %v675, 0.125
      %v697 = vmul.f32 %v677, 0.125
      %v698 = vmul.f32 %v679, 0.125
      %v699 = vadd.f32 %v680, 1e-05
      %v700 = vadd.f32 %v681, 1e-05
      %v701 = vadd.f32 %v682, 1e-05
      %v702 = vadd.f32 %v683, 1e-05
      %v703 = vadd.f32 %v684, 1e-05
      %v704 = vadd.f32 %v685, 1e-05
      %v705 = vadd.f32 %v686, 1e-05
      %v706 = vadd.f32 %v687, 1e-05
      %v707 = vadd.f32 %v688, 1e-05
      %v708 = vadd.f32 %v689, 1e-05
      %v709 = vadd.f32 %v690, 1e-05
      %v710 = vadd.f32 %v691, 1e-05
      %v711 = vadd.f32 %v692, 1e-05
      %v712 = vadd.f32 %v693, 1e-05
      %v713 = vadd.f32 %v694, 1e-05
      %v714 = vadd.f32 %v695, 1e-05
      %v715 = vadd.f32 %v696, 1e-05
      %v716 = vadd.f32 %v697, 1e-05
      %v717 = vadd.f32 %v698, 1e-05
      %v718 = vrsqrt.pop %v699
      %v719 = vrsqrt.pop %v700
      %v720 = vrsqrt.pop %v701
      %v721 = vrsqrt.pop %v702
      %v722 = vrsqrt.pop %v703
      %v723 = vrsqrt.pop %v704
      %v724 = vrsqrt.pop %v705
      %v725 = vrsqrt.pop %v706
      %v726 = vrsqrt.pop %v707
      %v727 = vrsqrt.pop %v708
      %v728 = vrsqrt.pop %v709
      %v729 = vrsqrt.pop %v710
      %v730 = vrsqrt.pop %v711
      %v731 = vrsqrt.pop %v712
      %v732 = vrsqrt.pop %v713
      %v733 = vrsqrt.pop %v714
      %v734 = vrsqrt.pop %v715
      %v735 = vrsqrt.pop %v716
      %v736 = vrsqrt.pop %v717
      %v737 = vmul.f32 %v604, %v718
      %v738 = vmul.f32 %v605, %v719
      %v739 = vmul.f32 %v606, %v720
      %v740 = vmul.f32 %v607, %v721
      %v741 = vmul.f32 %v608, %v722
      %v742 = vmul.f32 %v609, %v723
      %v743 = vmul.f32 %v610, %v724
      %v744 = vmul.f32 %v611, %v725
      %v745 = vmul.f32 %v612, %v726
      %v746 = vmul.f32 %v613, %v727
      %v747 = vmul.f32 %v614, %v728
      %v748 = vmul.f32 %v615, %v729
      %v749 = vmul.f32 %v616, %v730
      %v750 = vmul.f32 %v617, %v731
      %v751 = vmul.f32 %v618, %v732
      %v752 = vmul.f32 %v619, %v733
      %v753 = vmul.f32 %v620, %v734
      %v754 = vmul.f32 %v621, %v735
      %v755 = vmul.f32 %v622, %v736
      %v756 = vld [vmem:[%s2] sm:$0x1]
      %v758 = vlaneseq
      %v759 = vshrl.u32 %v758, 7
      %v760 = vsub.s32 0, %v759
      %v761 = vrot.slane %v756, %v760
      %v763 = vmul.f32 %v737, %v761
      %v764 = vmul.f32 %v738, %v761
      %v765 = vmul.f32 %v739, %v761
      %v766 = vmul.f32 %v740, %v761
      %v767 = vmul.f32 %v741, %v761
      %v768 = vmul.f32 %v742, %v761
      %v769 = vmul.f32 %v743, %v761
      %v770 = vmul.f32 %v744, %v761
      %v771 = vmul.f32 %v745, %v761
      %v772 = vmul.f32 %v746, %v761
      %v773 = vmul.f32 %v747, %v761
      %v774 = vmul.f32 %v748, %v761
      %v775 = vmul.f32 %v749, %v761
      %v776 = vmul.f32 %v750, %v761
      %v777 = vmul.f32 %v751, %v761
      %v778 = vmul.f32 %v752, %v761
      %v779 = vmul.f32 %v753, %v761
      %v780 = vmul.f32 %v754, %v761
      %v781 = vmul.f32 %v755, %v761
      %v782 = vld [vmem:[%s3] sm:$0x1]
      %v784 = vlaneseq
      %v785 = vshrl.u32 %v784, 7
      %v786 = vsub.s32 0, %v785
      %v787 = vrot.slane %v782, %v786
      %v789 = vadd.f32 %v763, %v787
      %v790 = vadd.f32 %v764, %v787
      %v791 = vadd.f32 %v765, %v787
      %v792 = vadd.f32 %v766, %v787
      %v793 = vadd.f32 %v767, %v787
      %v794 = vadd.f32 %v768, %v787
      %v795 = vadd.f32 %v769, %v787
      %v796 = vadd.f32 %v770, %v787
      %v797 = vadd.f32 %v771, %v787
      %v798 = vadd.f32 %v772, %v787
      %v799 = vadd.f32 %v773, %v787
      %v800 = vadd.f32 %v774, %v787
      %v801 = vadd.f32 %v775, %v787
      %v802 = vadd.f32 %v776, %v787
      %v803 = vadd.f32 %v777, %v787
      %v804 = vadd.f32 %v778, %v787
      %v805 = vadd.f32 %v779, %v787
      %v806 = vadd.f32 %v780, %v787
      %v807 = vadd.f32 %v781, %v787
      %v808 = vld [vmem:[%s4] sm:$0xff]
      %v809 = vld [vmem:[%s4 + $0x8] sm:$0xff]
      %v810 = vld [vmem:[%s4 + $0x10] sm:$0xff]
      %v811 = vld [vmem:[%s4 + $0x18] sm:$0xff]
      %v812 = vld [vmem:[%s4 + $0x20] sm:$0xff]
      %v813 = vld [vmem:[%s4 + $0x28] sm:$0xff]
      %v814 = vld [vmem:[%s4 + $0x30] sm:$0xff]
      %v815 = vld [vmem:[%s4 + $0x38] sm:$0xff]
      %v816 = vld [vmem:[%s4 + $0x40] sm:$0xff]
      %v817 = vld [vmem:[%s4 + $0x48] sm:$0xff]
      %v818 = vld [vmem:[%s4 + $0x50] sm:$0xff]
      %v819 = vld [vmem:[%s4 + $0x58] sm:$0xff]
      %v820 = vld [vmem:[%s4 + $0x60] sm:$0xff]
      %v821 = vld [vmem:[%s4 + $0x68] sm:$0xff]
      %v822 = vld [vmem:[%s4 + $0x70] sm:$0xff]
      %v823 = vld [vmem:[%s4 + $0x78] sm:$0xff]
      %824 = vmatprep.subr.mxu0 0.0
      %825 = vmatpush1.msra.mxu0 %v808
      %826 = vmatprep.subr.mxu0 0.0
      %827 = vmatpush1.msra.mxu0 %v809
      %828 = vmatprep.subr.mxu0 0.0
      %829 = vmatpush1.msra.mxu0 %v810
      %830 = vmatprep.subr.mxu0 0.0
      %831 = vmatpush1.msra.mxu0 %v811
      %832 = vmatprep.subr.mxu0 0.0
      %833 = vmatpush1.msra.mxu0 %v812
      %834 = vmatprep.subr.mxu0 0.0
      %835 = vmatpush1.msra.mxu0 %v813
      %836 = vmatprep.subr.mxu0 0.0
      %837 = vmatpush1.msra.mxu0 %v814
      %838 = vmatprep.subr.mxu0 0.0
      %839 = vmatpush1.msra.mxu0 %v815
      %840 = vmatprep.subr.mxu0 0.0
      %841 = vmatpush1.msra.mxu0 %v816
      %842 = vmatprep.subr.mxu0 0.0
      %843 = vmatpush1.msra.mxu0 %v817
      %844 = vmatprep.subr.mxu0 0.0
      %845 = vmatpush1.msra.mxu0 %v818
      %846 = vmatprep.subr.mxu0 0.0
      %847 = vmatpush1.msra.mxu0 %v819
      %848 = vmatprep.subr.mxu0 0.0
      %849 = vmatpush1.msra.mxu0 %v820
      %850 = vmatprep.subr.mxu0 0.0
      %851 = vmatpush1.msra.mxu0 %v821
      %852 = vmatprep.subr.mxu0 0.0
      %853 = vmatpush1.msra.mxu0 %v822
      %854 = vmatprep.subr.mxu0 0.0
      %855 = vmatpush1.msra.mxu0 %v823
      %856 = vmatprep.subr.mxu0 0.0
      %857 = vmatpush1.msra.mxu0 0.0
      %858 = vmatprep.subr.mxu0 0.0
      %859 = vmatpush1.msra.mxu0 0.0
      %860 = vmatprep.subr.mxu0 0.0
      %861 = vmatpush1.msra.mxu0 0.0
      %862 = vmatprep.subr.mxu0 0.0
      %863 = vmatpush1.msra.mxu0 0.0
      %864 = vmatprep.subr.mxu0 0.0
      %865 = vmatpush1.msra.mxu0 0.0
      %866 = vmatprep.subr.mxu0 0.0
      %867 = vmatpush1.msra.mxu0 0.0
      %868 = vmatprep.subr.mxu0 0.0
      %869 = vmatpush1.msra.mxu0 0.0
      %870 = vmatprep.subr.mxu0 0.0
      %871 = vmatpush1.msra.mxu0 0.0
      %872 = vmatprep.subr.mxu0 0.0
      %873 = vmatpush1.msra.mxu0 0.0
      %874 = vmatprep.subr.mxu0 0.0
      %875 = vmatpush1.msra.mxu0 0.0
      %876 = vmatprep.subr.mxu0 0.0
      %877 = vmatpush1.msra.mxu0 0.0
      %878 = vmatprep.subr.mxu0 0.0
      %879 = vmatpush1.msra.mxu0 0.0
      %880 = vmatprep.subr.mxu0 0.0
      %881 = vmatpush1.msra.mxu0 0.0
      %882 = vmatprep.subr.mxu0 0.0
      %883 = vmatpush1.msra.mxu0 0.0
      %884 = vmatprep.subr.mxu0 0.0
      %885 = vmatpush1.msra.mxu0 0.0
      %886 = vmatprep.subr.mxu0 0.0
      %887 = vmatpush1.msra.mxu0 0.0
      %888 = vmatprep.mubr.f32.mxu0 0.0
      %889 = vmatmul.mubr.f32.gmra.mrb[0].mxu0 %v789
      %v890 = vpop.f32.mrb[0].mxu0
      %v891 = vadd.f32 0.0, %v890
      %v892 = vpop.f32.mrb[0].mxu0
      %893 = vmatprep.mubr.f32.mxu0 0.0
      %894 = vmatmul.mubr.f32.gmra.mrb[0].mxu0 %v790
      %v895 = vpop.f32.mrb[0].mxu0
      %v896 = vadd.f32 0.0, %v895
      %v897 = vpop.f32.mrb[0].mxu0
      %898 = vmatprep.mubr.f32.mxu0 0.0
      %899 = vmatmul.mubr.f32.gmra.mrb[0].mxu0 %v791
      %v900 = vpop.f32.mrb[0].mxu0
      %v901 = vadd.f32 0.0, %v900
      %v902 = vpop.f32.mrb[0].mxu0
      %903 = vmatprep.mubr.f32.mxu0 0.0
      %904 = vmatmul.mubr.f32.gmra.mrb[0].mxu0 %v792
      %v905 = vpop.f32.mrb[0].mxu0
      %v906 = vadd.f32 0.0, %v905
      %v907 = vpop.f32.mrb[0].mxu0
      %908 = vmatprep.mubr.f32.mxu0 0.0
      %909 = vmatmul.mubr.f32.gmra.mrb[0].mxu0 %v793
      %v910 = vpop.f32.mrb[0].mxu0
      %v911 = vadd.f32 0.0, %v910
      %v912 = vpop.f32.mrb[0].mxu0
      %913 = vmatprep.mubr.f32.mxu0 0.0
      %914 = vmatmul.mubr.f32.gmra.mrb[0].mxu0 %v794
      %v915 = vpop.f32.mrb[0].mxu0
      %v916 = vadd.f32 0.0, %v915
      %v917 = vpop.f32.mrb[0].mxu0
      %918 = vmatprep.mubr.f32.mxu0 0.0
      %919 = vmatmul.mubr.f32.gmra.mrb[0].mxu0 %v795
      %v920 = vpop.f32.mrb[0].mxu0
      %v921 = vadd.f32 0.0, %v920
      %v922 = vpop.f32.mrb[0].mxu0
      %923 = vmatprep.mubr.f32.mxu0 0.0
      %924 = vmatmul.mubr.f32.gmra.mrb[0].mxu0 %v796
      %v925 = vpop.f32.mrb[0].mxu0
      %v926 = vadd.f32 0.0, %v925
      %v927 = vpop.f32.mrb[0].mxu0
      %928 = vmatprep.mubr.f32.mxu0 0.0
      %929 = vmatmul.mubr.f32.gmra.mrb[0].mxu0 %v797
      %v930 = vpop.f32.mrb[0].mxu0
      %v931 = vadd.f32 0.0, %v930
      %v932 = vpop.f32.mrb[0].mxu0
      %933 = vmatprep.mubr.f32.mxu0 0.0
      %934 = vmatmul.mubr.f32.gmra.mrb[0].mxu0 %v798
      %v935 = vpop.f32.mrb[0].mxu0
      %v936 = vadd.f32 0.0, %v935
      %v937 = vpop.f32.mrb[0].mxu0
      %938 = vmatprep.mubr.f32.mxu0 0.0
      %939 = vmatmul.mubr.f32.gmra.mrb[0].mxu0 %v799
      %v940 = vpop.f32.mrb[0].mxu0
      %v941 = vadd.f32 0.0, %v940
      %v942 = vpop.f32.mrb[0].mxu0
      %943 = vmatprep.mubr.f32.mxu0 0.0
      %944 = vmatmul.mubr.f32.gmra.mrb[0].mxu0 %v800
      %v945 = vpop.f32.mrb[0].mxu0
      %v946 = vadd.f32 0.0, %v945
      %v947 = vpop.f32.mrb[0].mxu0
      %948 = vmatprep.mubr.f32.mxu0 0.0
      %949 = vmatmul.mubr.f32.gmra.mrb[0].mxu0 %v801
      %v950 = vpop.f32.mrb[0].mxu0
      %v951 = vadd.f32 0.0, %v950
      %v952 = vpop.f32.mrb[0].mxu0
      %953 = vmatprep.mubr.f32.mxu0 0.0
      %954 = vmatmul.mubr.f32.gmra.mrb[0].mxu0 %v802
      %v955 = vpop.f32.mrb[0].mxu0
      %v956 = vadd.f32 0.0, %v955
      %v957 = vpop.f32.mrb[0].mxu0
      %958 = vmatprep.mubr.f32.mxu0 0.0
      %959 = vmatmul.mubr.f32.gmra.mrb[0].mxu0 %v803
      %v960 = vpop.f32.mrb[0].mxu0
      %v961 = vadd.f32 0.0, %v960
      %v962 = vpop.f32.mrb[0].mxu0
      %963 = vmatprep.mubr.f32.mxu0 0.0
      %964 = vmatmul.mubr.f32.gmra.mrb[0].mxu0 %v804
      %v965 = vpop.f32.mrb[0].mxu0
      %v966 = vadd.f32 0.0, %v965
      %v967 = vpop.f32.mrb[0].mxu0
      %968 = vmatprep.mubr.f32.mxu0 0.0
      %969 = vmatmul.mubr.f32.gmra.mrb[0].mxu0 %v805
      %v970 = vpop.f32.mrb[0].mxu0
      %v971 = vadd.f32 0.0, %v970
      %v972 = vpop.f32.mrb[0].mxu0
      %973 = vmatprep.mubr.f32.mxu0 0.0
      %974 = vmatmul.mubr.f32.gmra.mrb[0].mxu0 %v806
      %v975 = vpop.f32.mrb[0].mxu0
      %v976 = vadd.f32 0.0, %v975
      %v977 = vpop.f32.mrb[0].mxu0
      %978 = vmatprep.mubr.f32.mxu0 0.0
      %979 = vmatmul.mubr.f32.gmra.mrb[0].mxu0 %v807
      %v980 = vpop.f32.mrb[0].mxu0
      %v981 = vadd.f32 0.0, %v980
      %v982 = vpop.f32.mrb[0].mxu0
      %983 = vdwg.mxu0
      %v984 = vsel %vm305, %v891, 0.0
      %985 = vadd.xlane.f32.xlu0 %v984
      %v986 = vpop.xlane.xlu0 %985
      %v987 = vsel %vm305, %v896, 0.0
      %988 = vadd.xlane.f32.xlu0 %v987
      %v989 = vpop.xlane.xlu0 %988
      %v990 = vsel %vm305, %v901, 0.0
      %991 = vadd.xlane.f32.xlu0 %v990
      %v992 = vpop.xlane.xlu0 %991
      %v993 = vsel %vm305, %v906, 0.0
      %994 = vadd.xlane.f32.xlu0 %v993
      %v995 = vpop.xlane.xlu0 %994
      %v996 = vsel %vm305, %v911, 0.0
      %997 = vadd.xlane.f32.xlu0 %v996
      %v998 = vpop.xlane.xlu0 %997
      %v999 = vsel %vm305, %v916, 0.0
      %1000 = vadd.xlane.f32.xlu0 %v999
      %v1001 = vpop.xlane.xlu0 %1000
      %v1002 = vsel %vm305, %v921, 0.0
      %1003 = vadd.xlane.f32.xlu0 %v1002
      %v1004 = vpop.xlane.xlu0 %1003
      %v1005 = vsel %vm305, %v926, 0.0
      %1006 = vadd.xlane.f32.xlu0 %v1005
      %v1007 = vpop.xlane.xlu0 %1006
      %v1008 = vsel %vm305, %v931, 0.0
      %1009 = vadd.xlane.f32.xlu0 %v1008
      %v1010 = vpop.xlane.xlu0 %1009
      %v1011 = vsel %vm305, %v936, 0.0
      %1012 = vadd.xlane.f32.xlu0 %v1011
      %v1013 = vpop.xlane.xlu0 %1012
      %v1014 = vsel %vm305, %v941, 0.0
      %1015 = vadd.xlane.f32.xlu0 %v1014
      %v1016 = vpop.xlane.xlu0 %1015
      %v1017 = vsel %vm305, %v946, 0.0
      %1018 = vadd.xlane.f32.xlu0 %v1017
      %v1019 = vpop.xlane.xlu0 %1018
      %v1020 = vsel %vm305, %v951, 0.0
      %1021 = vadd.xlane.f32.xlu0 %v1020
      %v1022 = vpop.xlane.xlu0 %1021
      %v1023 = vsel %vm305, %v956, 0.0
      %1024 = vadd.xlane.f32.xlu0 %v1023
      %v1025 = vpop.xlane.xlu0 %1024
      %v1026 = vsel %vm305, %v961, 0.0
      %1027 = vadd.xlane.f32.xlu0 %v1026
      %v1028 = vpop.xlane.xlu0 %1027
      %v1029 = vsel %vm305, %v966, 0.0
      %1030 = vadd.xlane.f32.xlu0 %v1029
      %v1031 = vpop.xlane.xlu0 %1030
      %v1032 = vsel %vm305, %v971, 0.0
      %1033 = vadd.xlane.f32.xlu0 %v1032
      %v1034 = vpop.xlane.xlu0 %1033
      %v1035 = vsel %vm305, %v976, 0.0
      %1036 = vadd.xlane.f32.xlu0 %v1035
      %v1037 = vpop.xlane.xlu0 %1036
      %v1038 = vsel %vm305, %v981, 0.0
      %1039 = vadd.xlane.f32.xlu0 %v1038
      %v1040 = vpop.xlane.xlu0 %1039
      %v1041 = vmul.f32 %v986, 0.03125
      %v1042 = vmul.f32 %v989, 0.03125
      %v1043 = vmul.f32 %v992, 0.03125
      %v1044 = vmul.f32 %v995, 0.03125
      %v1045 = vmul.f32 %v998, 0.03125
      %v1046 = vmul.f32 %v1001, 0.03125
      %v1047 = vmul.f32 %v1004, 0.03125
      %v1048 = vmul.f32 %v1007, 0.03125
      %v1049 = vmul.f32 %v1010, 0.03125
      %v1050 = vmul.f32 %v1013, 0.03125
      %v1051 = vmul.f32 %v1016, 0.03125
      %v1052 = vmul.f32 %v1019, 0.03125
      %v1053 = vmul.f32 %v1022, 0.03125
      %v1054 = vmul.f32 %v1025, 0.03125
      %v1055 = vmul.f32 %v1028, 0.03125
      %v1056 = vmul.f32 %v1031, 0.03125
      %v1057 = vmul.f32 %v1034, 0.03125
      %v1058 = vmul.f32 %v1037, 0.03125
      %v1059 = vmul.f32 %v1040, 0.03125
      %v1060 = vsub.f32 %v891, %v1041
      %v1061 = vsub.f32 %v896, %v1042
      %v1062 = vsub.f32 %v901, %v1043
      %v1063 = vsub.f32 %v906, %v1044
      %v1064 = vsub.f32 %v911, %v1045
      %v1065 = vsub.f32 %v916, %v1046
      %v1066 = vsub.f32 %v921, %v1047
      %v1067 = vsub.f32 %v926, %v1048
      %v1068 = vsub.f32 %v931, %v1049
      %v1069 = vsub.f32 %v936, %v1050
      %v1070 = vsub.f32 %v941, %v1051
      %v1071 = vsub.f32 %v946, %v1052
      %v1072 = vsub.f32 %v951, %v1053
      %v1073 = vsub.f32 %v956, %v1054
      %v1074 = vsub.f32 %v961, %v1055
      %v1075 = vsub.f32 %v966, %v1056
      %v1076 = vsub.f32 %v971, %v1057
      %v1077 = vsub.f32 %v976, %v1058
      %v1078 = vsub.f32 %v981, %v1059
      %v1079 = vmul.f32 %v1060, %v1060
      %v1080 = vmul.f32 %v1061, %v1061
      %v1081 = vmul.f32 %v1062, %v1062
      %v1082 = vmul.f32 %v1063, %v1063
      %v1083 = vmul.f32 %v1064, %v1064
      %v1084 = vmul.f32 %v1065, %v1065
      %v1085 = vmul.f32 %v1066, %v1066
      %v1086 = vmul.f32 %v1067, %v1067
      %v1087 = vmul.f32 %v1068, %v1068
      %v1088 = vmul.f32 %v1069, %v1069
      %v1089 = vmul.f32 %v1070, %v1070
      %v1090 = vmul.f32 %v1071, %v1071
      %v1091 = vmul.f32 %v1072, %v1072
      %v1092 = vmul.f32 %v1073, %v1073
      %v1093 = vmul.f32 %v1074, %v1074
      %v1094 = vmul.f32 %v1075, %v1075
      %v1095 = vmul.f32 %v1076, %v1076
      %v1096 = vmul.f32 %v1077, %v1077
      %v1097 = vmul.f32 %v1078, %v1078
      %v1098 = vsel %vm305, %v1079, 0.0
      %1099 = vadd.xlane.f32.xlu0 %v1098
      %v1100 = vpop.xlane.xlu0 %1099
      %v1101 = vsel %vm305, %v1080, 0.0
      %1102 = vadd.xlane.f32.xlu0 %v1101
      %v1103 = vpop.xlane.xlu0 %1102
      %v1104 = vsel %vm305, %v1081, 0.0
      %1105 = vadd.xlane.f32.xlu0 %v1104
      %v1106 = vpop.xlane.xlu0 %1105
      %v1107 = vsel %vm305, %v1082, 0.0
      %1108 = vadd.xlane.f32.xlu0 %v1107
      %v1109 = vpop.xlane.xlu0 %1108
      %v1110 = vsel %vm305, %v1083, 0.0
      %1111 = vadd.xlane.f32.xlu0 %v1110
      %v1112 = vpop.xlane.xlu0 %1111
      %v1113 = vsel %vm305, %v1084, 0.0
      %1114 = vadd.xlane.f32.xlu0 %v1113
      %v1115 = vpop.xlane.xlu0 %1114
      %v1116 = vsel %vm305, %v1085, 0.0
      %1117 = vadd.xlane.f32.xlu0 %v1116
      %v1118 = vpop.xlane.xlu0 %1117
      %v1119 = vsel %vm305, %v1086, 0.0
      %1120 = vadd.xlane.f32.xlu0 %v1119
      %v1121 = vpop.xlane.xlu0 %1120
      %v1122 = vsel %vm305, %v1087, 0.0
      %1123 = vadd.xlane.f32.xlu0 %v1122
      %v1124 = vpop.xlane.xlu0 %1123
      %v1125 = vsel %vm305, %v1088, 0.0
      %1126 = vadd.xlane.f32.xlu0 %v1125
      %v1127 = vpop.xlane.xlu0 %1126
      %v1128 = vsel %vm305, %v1089, 0.0
      %1129 = vadd.xlane.f32.xlu0 %v1128
      %v1130 = vpop.xlane.xlu0 %1129
      %v1131 = vsel %vm305, %v1090, 0.0
      %1132 = vadd.xlane.f32.xlu0 %v1131
      %v1133 = vpop.xlane.xlu0 %1132
      %v1134 = vsel %vm305, %v1091, 0.0
      %1135 = vadd.xlane.f32.xlu0 %v1134
      %v1136 = vpop.xlane.xlu0 %1135
      %v1137 = vsel %vm305, %v1092, 0.0
      %1138 = vadd.xlane.f32.xlu0 %v1137
      %v1139 = vpop.xlane.xlu0 %1138
      %v1140 = vsel %vm305, %v1093, 0.0
      %1141 = vadd.xlane.f32.xlu0 %v1140
      %v1142 = vpop.xlane.xlu0 %1141
      %v1143 = vsel %vm305, %v1094, 0.0
      %1144 = vadd.xlane.f32.xlu0 %v1143
      %v1145 = vpop.xlane.xlu0 %1144
      %v1146 = vsel %vm305, %v1095, 0.0
      %1147 = vadd.xlane.f32.xlu0 %v1146
      %v1148 = vpop.xlane.xlu0 %1147
      %v1149 = vsel %vm305, %v1096, 0.0
      %1150 = vadd.xlane.f32.xlu0 %v1149
      %v1151 = vpop.xlane.xlu0 %1150
      %v1152 = vsel %vm305, %v1097, 0.0
      %1153 = vadd.xlane.f32.xlu0 %v1152
      %v1154 = vpop.xlane.xlu0 %1153
      %v1155 = vmul.f32 %v1100, 0.03125
      %v1156 = vmul.f32 %v1103, 0.03125
      %v1157 = vmul.f32 %v1106, 0.03125
      %v1158 = vmul.f32 %v1109, 0.03125
      %v1159 = vmul.f32 %v1112, 0.03125
      %v1160 = vmul.f32 %v1115, 0.03125
      %v1161 = vmul.f32 %v1118, 0.03125
      %v1162 = vmul.f32 %v1121, 0.03125
      %v1163 = vmul.f32 %v1124, 0.03125
      %v1164 = vmul.f32 %v1127, 0.03125
      %v1165 = vmul.f32 %v1130, 0.03125
      %v1166 = vmul.f32 %v1133, 0.03125
      %v1167 = vmul.f32 %v1136, 0.03125
      %v1168 = vmul.f32 %v1139, 0.03125
      %v1169 = vmul.f32 %v1142, 0.03125
      %v1170 = vmul.f32 %v1145, 0.03125
      %v1171 = vmul.f32 %v1148, 0.03125
      %v1172 = vmul.f32 %v1151, 0.03125
      %v1173 = vmul.f32 %v1154, 0.03125
      %v1174 = vadd.f32 %v1155, 1e-05
      %v1175 = vadd.f32 %v1156, 1e-05
      %v1176 = vadd.f32 %v1157, 1e-05
      %v1177 = vadd.f32 %v1158, 1e-05
      %v1178 = vadd.f32 %v1159, 1e-05
      %v1179 = vadd.f32 %v1160, 1e-05
      %v1180 = vadd.f32 %v1161, 1e-05
      %v1181 = vadd.f32 %v1162, 1e-05
      %v1182 = vadd.f32 %v1163, 1e-05
      %v1183 = vadd.f32 %v1164, 1e-05
      %v1184 = vadd.f32 %v1165, 1e-05
      %v1185 = vadd.f32 %v1166, 1e-05
      %v1186 = vadd.f32 %v1167, 1e-05
      %v1187 = vadd.f32 %v1168, 1e-05
      %v1188 = vadd.f32 %v1169, 1e-05
      %v1189 = vadd.f32 %v1170, 1e-05
      %v1190 = vadd.f32 %v1171, 1e-05
      %v1191 = vadd.f32 %v1172, 1e-05
      %v1192 = vadd.f32 %v1173, 1e-05
      %v1193 = vrsqrt.pop %v1174
      %v1194 = vrsqrt.pop %v1175
      %v1195 = vrsqrt.pop %v1176
      %v1196 = vrsqrt.pop %v1177
      %v1197 = vrsqrt.pop %v1178
      %v1198 = vrsqrt.pop %v1179
      %v1199 = vrsqrt.pop %v1180
      %v1200 = vrsqrt.pop %v1181
      %v1201 = vrsqrt.pop %v1182
      %v1202 = vrsqrt.pop %v1183
      %v1203 = vrsqrt.pop %v1184
      %v1204 = vrsqrt.pop %v1185
      %v1205 = vrsqrt.pop %v1186
      %v1206 = vrsqrt.pop %v1187
      %v1207 = vrsqrt.pop %v1188
      %v1208 = vrsqrt.pop %v1189
      %v1209 = vrsqrt.pop %v1190
      %v1210 = vrsqrt.pop %v1191
      %v1211 = vrsqrt.pop %v1192
      %v1212 = vmul.f32 %v1060, %v1193
      %v1213 = vmul.f32 %v1061, %v1194
      %v1214 = vmul.f32 %v1062, %v1195
      %v1215 = vmul.f32 %v1063, %v1196
      %v1216 = vmul.f32 %v1064, %v1197
      %v1217 = vmul.f32 %v1065, %v1198
      %v1218 = vmul.f32 %v1066, %v1199
      %v1219 = vmul.f32 %v1067, %v1200
      %v1220 = vmul.f32 %v1068, %v1201
      %v1221 = vmul.f32 %v1069, %v1202
      %v1222 = vmul.f32 %v1070, %v1203
      %v1223 = vmul.f32 %v1071, %v1204
      %v1224 = vmul.f32 %v1072, %v1205
      %v1225 = vmul.f32 %v1073, %v1206
      %v1226 = vmul.f32 %v1074, %v1207
      %v1227 = vmul.f32 %v1075, %v1208
      %v1228 = vmul.f32 %v1076, %v1209
      %v1229 = vmul.f32 %v1077, %v1210
      %v1230 = vmul.f32 %v1078, %v1211
      %v1231 = vld [vmem:[%s5] sm:$0x1]
      %v1233 = vlaneseq
      %v1234 = vshrl.u32 %v1233, 7
      %v1235 = vsub.s32 0, %v1234
      %v1236 = vrot.slane %v1231, %v1235
      %v1238 = vmul.f32 %v1212, %v1236
      %v1239 = vmul.f32 %v1213, %v1236
      %v1240 = vmul.f32 %v1214, %v1236
      %v1241 = vmul.f32 %v1215, %v1236
      %v1242 = vmul.f32 %v1216, %v1236
      %v1243 = vmul.f32 %v1217, %v1236
      %v1244 = vmul.f32 %v1218, %v1236
      %v1245 = vmul.f32 %v1219, %v1236
      %v1246 = vmul.f32 %v1220, %v1236
      %v1247 = vmul.f32 %v1221, %v1236
      %v1248 = vmul.f32 %v1222, %v1236
      %v1249 = vmul.f32 %v1223, %v1236
      %v1250 = vmul.f32 %v1224, %v1236
      %v1251 = vmul.f32 %v1225, %v1236
      %v1252 = vmul.f32 %v1226, %v1236
      %v1253 = vmul.f32 %v1227, %v1236
      %v1254 = vmul.f32 %v1228, %v1236
      %v1255 = vmul.f32 %v1229, %v1236
      %v1256 = vmul.f32 %v1230, %v1236
      %v1257 = vld [vmem:[%s6] sm:$0x1]
      %v1259 = vlaneseq
      %v1260 = vshrl.u32 %v1259, 7
      %v1261 = vsub.s32 0, %v1260
      %v1262 = vrot.slane %v1257, %v1261
      %v1264 = vadd.f32 %v1238, %v1262
      %v1265 = vadd.f32 %v1239, %v1262
      %v1266 = vadd.f32 %v1240, %v1262
      %v1267 = vadd.f32 %v1241, %v1262
      %v1268 = vadd.f32 %v1242, %v1262
      %v1269 = vadd.f32 %v1243, %v1262
      %v1270 = vadd.f32 %v1244, %v1262
      %v1271 = vadd.f32 %v1245, %v1262
      %v1272 = vadd.f32 %v1246, %v1262
      %v1273 = vadd.f32 %v1247, %v1262
      %v1274 = vadd.f32 %v1248, %v1262
      %v1275 = vadd.f32 %v1249, %v1262
      %v1276 = vadd.f32 %v1250, %v1262
      %v1277 = vadd.f32 %v1251, %v1262
      %v1278 = vadd.f32 %v1252, %v1262
      %v1279 = vadd.f32 %v1253, %v1262
      %v1280 = vadd.f32 %v1254, %v1262
      %v1281 = vadd.f32 %v1255, %v1262
      %v1282 = vadd.f32 %v1256, %v1262
      %v1283 = vmul.f32 %v1264, 0.2
      %v1284 = vmul.f32 %v1265, 0.2
      %v1285 = vmul.f32 %v1266, 0.2
      %v1286 = vmul.f32 %v1267, 0.2
      %v1287 = vmul.f32 %v1268, 0.2
      %v1288 = vmul.f32 %v1269, 0.2
      %v1289 = vmul.f32 %v1270, 0.2
      %v1290 = vmul.f32 %v1271, 0.2
      %v1291 = vmul.f32 %v1272, 0.2
      %v1292 = vmul.f32 %v1273, 0.2
      %v1293 = vmul.f32 %v1274, 0.2
      %v1294 = vmul.f32 %v1275, 0.2
      %v1295 = vmul.f32 %v1276, 0.2
      %v1296 = vmul.f32 %v1277, 0.2
      %v1297 = vmul.f32 %v1278, 0.2
      %v1298 = vmul.f32 %v1279, 0.2
      %v1299 = vmul.f32 %v1280, 0.2
      %v1300 = vmul.f32 %v1281, 0.2
      %v1301 = vmul.f32 %v1282, 0.2
      %v1302 = vmul.f32 %v282, 0.8
      %v1303 = vmul.f32 %v283, 0.8
      %v1304 = vmul.f32 %v284, 0.8
      %v1305 = vmul.f32 %v285, 0.8
      %v1306 = vmul.f32 %v286, 0.8
      %v1307 = vmul.f32 %v287, 0.8
      %v1308 = vmul.f32 %v288, 0.8
      %v1309 = vmul.f32 %v289, 0.8
      %v1310 = vmul.f32 %v290, 0.8
      %v1311 = vmul.f32 %v291, 0.8
      %v1312 = vmul.f32 %v292, 0.8
      %v1313 = vmul.f32 %v293, 0.8
      %v1314 = vmul.f32 %v294, 0.8
      %v1315 = vmul.f32 %v295, 0.8
      %v1316 = vmul.f32 %v296, 0.8
      %v1317 = vmul.f32 %v297, 0.8
      %v1318 = vmul.f32 %v298, 0.8
      %v1319 = vmul.f32 %v299, 0.8
      %v1320 = vmul.f32 %v300, 0.8
      %v1321 = vadd.f32 %v1283, %v1302
      %v1322 = vadd.f32 %v1284, %v1303
      %v1323 = vadd.f32 %v1285, %v1304
      %v1324 = vadd.f32 %v1286, %v1305
      %v1325 = vadd.f32 %v1287, %v1306
      %v1326 = vadd.f32 %v1288, %v1307
      %v1327 = vadd.f32 %v1289, %v1308
      %v1328 = vadd.f32 %v1290, %v1309
      %v1329 = vadd.f32 %v1291, %v1310
      %v1330 = vadd.f32 %v1292, %v1311
      %v1331 = vadd.f32 %v1293, %v1312
      %v1332 = vadd.f32 %v1294, %v1313
      %v1333 = vadd.f32 %v1295, %v1314
      %v1334 = vadd.f32 %v1296, %v1315
      %v1335 = vadd.f32 %v1297, %v1316
      %v1336 = vadd.f32 %v1298, %v1317
      %v1337 = vadd.f32 %v1299, %v1318
      %v1338 = vadd.f32 %v1300, %v1319
      %v1339 = vadd.f32 %v1301, %v1320
      %1340 = vst.msk [vmem:[%s280] sm:$0xff] %vm305, %v1321
      %1341 = vst.msk [vmem:[%s280 + $0x8] sm:$0xff] %vm305, %v1322
      %1342 = vst.msk [vmem:[%s280 + $0x10] sm:$0xff] %vm305, %v1323
      %1343 = vst.msk [vmem:[%s280 + $0x18] sm:$0xff] %vm305, %v1324
      %1344 = vst.msk [vmem:[%s280 + $0x20] sm:$0xff] %vm305, %v1325
      %1345 = vst.msk [vmem:[%s280 + $0x28] sm:$0xff] %vm305, %v1326
      %1346 = vst.msk [vmem:[%s280 + $0x30] sm:$0xff] %vm305, %v1327
      %1347 = vst.msk [vmem:[%s280 + $0x38] sm:$0xff] %vm305, %v1328
      %1348 = vst.msk [vmem:[%s280 + $0x40] sm:$0xff] %vm305, %v1329
      %1349 = vst.msk [vmem:[%s280 + $0x48] sm:$0xff] %vm305, %v1330
      %1350 = vst.msk [vmem:[%s280 + $0x50] sm:$0xff] %vm305, %v1331
      %1351 = vst.msk [vmem:[%s280 + $0x58] sm:$0xff] %vm305, %v1332
      %1352 = vst.msk [vmem:[%s280 + $0x60] sm:$0xff] %vm305, %v1333
      %1353 = vst.msk [vmem:[%s280 + $0x68] sm:$0xff] %vm305, %v1334
      %1354 = vst.msk [vmem:[%s280 + $0x70] sm:$0xff] %vm305, %v1335
      %1355 = vst.msk [vmem:[%s280 + $0x78] sm:$0xff] %vm305, %v1336
      %1356 = vst.msk [vmem:[%s280 + $0x80] sm:$0xff] %vm305, %v1337
      %1357 = vst.msk [vmem:[%s280 + $0x88] sm:$0xff] %vm305, %v1338
      %1358 = vst.msk [vmem:[%s280 + $0x90] sm:$0xff] %vm305, %v1339
      %s1359 = smul.u32 19, %s18
      %p1360 = scmp.lt.s32.totalorder %s1359, 37
      %s1361 = scalar_select %p1360, %s1359, 37
      %s1362 = smul.addr %s1361, 8
      %s1363 = scalar_lea.vmem %s7, %s1362
      // Predicated region
      $region49: #{tpu_custom_call.1} parent=47 // pred_check
        %p1364 = pneg %p188
      $region50: #{tpu_custom_call.1} parent=47 // pred_check_branch
        %1366 = sbr.rel (%p1364) target = $region52
      $region51: #{tpu_custom_call.1} parent=47 // pred_region
        %s1367 = smul.u32 19, %s18
      $region52: #{tpu_custom_call.1} parent=47 // pred_fallthru
        _
    $region48: #{tpu_custom_call.1} parent=5 // pred_fallthru
      _
    %p1368 = scmp.le.s32.totalorder 2, %s13
    // Predicated region
    $region53: #{tpu_custom_call.1} parent=5 // pred_check
      %p1369 = pneg %p1368
    $region54: #{tpu_custom_call.1} parent=5 // pred_check_branch
      %1371 = sbr.rel (%p1369) target = $region56
    $region55: #{tpu_custom_call.1} parent=5 // pred_region
      %s1372 = ssub.s32 %s13, 2
      // Predicated region
      $region57: #{tpu_custom_call.1} parent=55 // pred_check
        %p1373 = pneg %p194
      $region58: #{tpu_custom_call.1} parent=55 // pred_check_branch
        %1375 = sbr.rel (%p1373) target = $region60
      $region59: #{tpu_custom_call.1} parent=55 // pred_region
        %s1376 = smul.u32 19, %s19
        %p1377 = scmp.lt.s32.totalorder %s1376, 37
        %s1378 = scalar_select %p1377, %s1376, 37
        %s1379 = smul.addr %s1378, 8
        %s1380 = scalar_lea.vmem %s7, %s1379
      $region60: #{tpu_custom_call.1} parent=55 // pred_fallthru
        _
    $region56: #{tpu_custom_call.1} parent=5 // pred_fallthru
      _
  $region6: #{tpu_custom_call.1} parent=0 // loop_footer
    %s17 = sadd.s32 1, %s13
  $region7: #{tpu_custom_call.1} parent=0 // loop_footer_branch
    %12 = sbr.rel target = $region3
  $region8: #{tpu_custom_call.1} parent=0 // loop_exit
    _

</llo_original>
